<compile_context>
chip_gen: v7x
topology: tpu7x:2x2x1
jax: 0.10.0
libtpu: 0.0.40
codegen_flags: <defaults>
</compile_context>

<pallas_src>
import functools

import jax
import jax.numpy as jnp
from jax.experimental import pallas as pl
from jax.experimental.pallas import tpu as pltpu


# ---------------------------------------------------------------------------
# Model configuration (small shapes, consistent with the module's __init__)
# ---------------------------------------------------------------------------
INPUT_DIM = 4          # conditioning input dim
OUTPUT_DIM = 3         # final output dim
NUM_LAYERS = 10        # base network layers (must be even) -> half = 5
NUM_LAYERS_INJECT = 4  # injection network hidden layers
NUM_NEURON_INJECT = 64 # neurons per injection layer (module default 500)
NUM_NEURONS = 32       # neurons per base layer      (module default 50)
LN_EPS = 1e-5          # torch.nn.LayerNorm default eps

HALF_LAYERS = NUM_LAYERS // 2
N_INJECT_HID = NUM_LAYERS_INJECT - 1   # 3 stacked hidden inject layers
N_AFTER_HID = HALF_LAYERS - 1          # 4 stacked after layers (1st is fused)

# Lane-pack factor: 4 independent rows share the lane dimension.
# 4 * 64 = 256 lanes fills one v6e/v7x MXU tile; 4 * 32 = 128 fills v5e lanes.
PACK = 4

# Bias-slab row layout (f32, width = PACK * NUM_NEURON_INJECT).
ROW_IB0 = 0
ROW_IBH = ROW_IB0 + 1                  # N_INJECT_HID rows
ROW_IBL = ROW_IBH + N_INJECT_HID
ROW_B0 = ROW_IBL + 1
ROW_ABH = ROW_B0 + 1                   # N_AFTER_HID rows
ROW_ABL = ROW_ABH + N_AFTER_HID
N_BIAS_ROWS = ROW_ABL + 1


# ---------------------------------------------------------------------------
# Deterministic parameter initialization (no checkpoint loading)
# ---------------------------------------------------------------------------
def init_params(key):
    def linear(key, fan_in, fan_out):
        kw, kb = jax.random.split(key)
        scale = 1.0 / jnp.sqrt(jnp.float32(fan_in))
        w = jax.random.uniform(kw, (fan_in, fan_out), jnp.float32, -scale, scale)
        b = jax.random.uniform(kb, (fan_out,), jnp.float32, -scale, scale)
        return w, b

    keys = jax.random.split(key, 17)
    ki = iter(range(len(keys)))

    # model_before_inject: 5 -> NUM_NEURONS, then NUM_NEURONS -> NUM_NEURONS
    before = [linear(keys[next(ki)], 5, NUM_NEURONS)]
    for _ in range(HALF_LAYERS - 1):
        before.append(linear(keys[next(ki)], NUM_NEURONS, NUM_NEURONS))

    # inject: INPUT_DIM -> NI, NI -> NI (x3), NI -> 2
    inject = [linear(keys[next(ki)], INPUT_DIM, NUM_NEURON_INJECT)]
    for _ in range(NUM_LAYERS_INJECT - 1):
        inject.append(linear(keys[next(ki)], NUM_NEURON_INJECT, NUM_NEURON_INJECT))
    inject.append(linear(keys[next(ki)], NUM_NEURON_INJECT, 2))

    # layer norm (elementwise affine, torch defaults: gamma=1, beta=0)
    ln_gamma = jnp.ones((NUM_NEURONS,), jnp.float32)
    ln_beta = jnp.zeros((NUM_NEURONS,), jnp.float32)

    # model_after_inject: NUM_NEURONS -> NUM_NEURONS (x5), NUM_NEURONS -> OUTPUT_DIM
    after = [linear(keys[next(ki)], NUM_NEURONS, NUM_NEURONS)
             for _ in range(HALF_LAYERS)]
    after.append(linear(keys[next(ki)], NUM_NEURONS, OUTPUT_DIM))

    return {"before": before, "inject": inject, "ln": (ln_gamma, ln_beta),
            "after": after}


# ---------------------------------------------------------------------------
# Pallas kernel: lane-packed inject MLP + matmul-folded AdaIN + after MLP
# ---------------------------------------------------------------------------
def adain_kernel(x_ref, iw0_ref, iwh_ref, iwl_ref, uv_ref, awh_ref, awl_ref,
                 bias_ref, o_ref):
    f32 = jnp.float32
    wdt = iw0_ref.dtype                      # bf16 on the fast path, f32 otherwise
    NIp = PACK * NUM_NEURON_INJECT
    NP = PACK * NUM_NEURONS
    P2 = PACK * 2
    PO = PACK * OUTPUT_DIM

    def bias_row(r, width):
        # Load one full bias row (lane-dense), slice as a value.
        return bias_ref[r:r + 1, :][:, :width]

    x = x_ref[...].astype(wdt)                                     # (tm, PACK*4)

    # ---- inject MLP (block-diagonal weights, PACK rows per vreg-row) -------
    h = jnp.dot(x, iw0_ref[...], preferred_element_type=f32)
    h = jnp.maximum(h + bias_row(ROW_IB0, NIp), 0.0).astype(wdt)
    for i in range(N_INJECT_HID):
        h = jnp.dot(h, iwh_ref[i], preferred_element_type=f32)
        h = jnp.maximum(h + bias_row(ROW_IBH + i, NIp), 0.0).astype(wdt)
    sc = jnp.dot(h, iwl_ref[...], preferred_element_type=f32) \
        + bias_row(ROW_IBL, P2)                                    # (tm, PACK*2)

    # ---- AdaIN folded into the first 'after' layer as a K=2 matmul ---------
    # Even packed columns carry the s-logits, odd columns carry c:
    #   relu((s*y_ln + c) @ W0 + b0) == relu([s, c] @ [y_ln@W0; colsum(W0)] + b0)
    col = jax.lax.broadcasted_iota(jnp.int32, sc.shape, 1)
    sc_mod = jnp.where(col % 2 == 0, jnp.maximum(1.0 + sc, 0.0), sc).astype(wdt)
    h2 = jnp.dot(sc_mod, uv_ref[...], preferred_element_type=f32)
    h2 = jnp.maximum(h2 + bias_row(ROW_B0, NP), 0.0).astype(wdt)

    # ---- remaining after-inject MLP -----------------------------------------
    for i in range(N_AFTER_HID):
        h2 = jnp.dot(h2, awh_ref[i], preferred_element_type=f32)
        h2 = jnp.maximum(h2 + bias_row(ROW_ABH + i, NP), 0.0).astype(wdt)
    out = jnp.dot(h2, awl_ref[...], preferred_element_type=f32) \
        + bias_row(ROW_ABL, PO)                                    # (tm, PACK*3)

    o_ref[...] = out.astype(o_ref.dtype)


# ---------------------------------------------------------------------------
# Wrapper helpers: parameter packing, tile selection
# ---------------------------------------------------------------------------
def _pack_kernel_params(params, weight_dtype):
    before, inj, aft = params["before"], params["inject"], params["after"]
    gamma, beta = params["ln"]

    # Row-invariant 'before' MLP on ones(5) + LayerNorm, hoisted out of kernel.
    y = jnp.ones((1, 5), jnp.float32)
    for w, b in before:
        y = jnp.maximum(y @ w + b, 0.0)
    mean = jnp.mean(y, axis=-1, keepdims=True)
    var = jnp.mean((y - mean) ** 2, axis=-1, keepdims=True)
    y_ln = (y - mean) * jax.lax.rsqrt(var + LN_EPS) * gamma + beta   # (1, N)

    # Fold AdaIN + first 'after' linear:
    #   (s*y_ln + c) @ W0 + b0 == s*(y_ln@W0) + c*colsum(W0) + b0
    aw0, ab0 = aft[0]
    u0 = y_ln @ aw0
    v0 = jnp.sum(aw0, axis=0, keepdims=True)
    uv = jnp.concatenate([u0, v0], axis=0)                            # (2, N)

    def bd(w):  # block-diagonal lane packing: PACK independent copies
        return jnp.kron(jnp.eye(PACK, dtype=jnp.float32),
                        w.astype(jnp.float32))

    def tile(b):
        return jnp.tile(jnp.asarray(b, jnp.float32).reshape(-1), PACK)

    wd = weight_dtype
    iw0_bd = bd(inj[0][0]).astype(wd)                                 # (16, 256)
    iwh_bd = jnp.stack([bd(w) for w, _ in inj[1:-1]]).astype(wd)      # (3, 256, 256)
    iwl_bd = bd(inj[-1][0]).astype(wd)                                # (256, 8)
    uv_bd = bd(uv).astype(wd)                                         # (8, 128)
    awh_bd = jnp.stack([bd(w) for w, _ in aft[1:-1]]).astype(wd)      # (4, 128, 128)
    awl_bd = bd(aft[-1][0]).astype(wd)                                # (128, 12)

    # All biases in one f32 slab (kept f32: bias/ReLU epilogue stays f32).
    NIp = PACK * NUM_NEURON_INJECT
    bias = jnp.zeros((N_BIAS_ROWS, NIp), jnp.float32)
    bias = bias.at[ROW_IB0, :].set(tile(inj[0][1]))
    for i in range(N_INJECT_HID):
        bias = bias.at[ROW_IBH + i, :].set(tile(inj[1 + i][1]))
    bias = bias.at[ROW_IBL, :PACK * 2].set(tile(inj[-1][1]))
    bias = bias.at[ROW_B0, :PACK * NUM_NEURONS].set(tile(ab0))
    for i in range(N_AFTER_HID):
        bias = bias.at[ROW_ABH + i, :PACK * NUM_NEURONS].set(tile(aft[1 + i][1]))
    bias = bias.at[ROW_ABL, :PACK * OUTPUT_DIM].set(tile(aft[-1][1]))

    return (iw0_bd, iwh_bd, iwl_bd, uv_bd, awh_bd, awl_bd, bias)


def _choose_tm(mp, tm_cap=512, min_steps=4):
    """Packed-row tile: big (<= tm_cap ~= 2048 original rows) but with at least
    `min_steps` grid steps and an even step count so v7x's two TensorCores each
    get >= 2 balanced steps."""
    steps = max(min_steps, pl.cdiv(mp, tm_cap))
    steps += steps % 2
    tm = pl.cdiv(mp, steps)
    return max(8, ((tm + 7) // 8) * 8)


def _replicated(nd):
    return lambda i, _nd=nd: (0,) * _nd


# ---------------------------------------------------------------------------
# Forward wrapper
# ---------------------------------------------------------------------------
@functools.partial(jax.jit, static_argnames=("tm", "weight_dtype"))
def h_theta_adain_forward(x, params, *, tm=None, weight_dtype=jnp.bfloat16):
    B, N, din = x.shape
    assert din == INPUT_DIM
    M = B * N
    x2 = x.reshape(M, din).astype(jnp.float32)

    mp = pl.cdiv(M, PACK)
    if tm is None:
        tm = _choose_tm(mp)
    grid = pl.cdiv(mp, tm)
    mp_pad = grid * tm
    m_pad = mp_pad * PACK
    if m_pad != M:
        x2 = jnp.pad(x2, ((0, m_pad - M), (0, 0)))
    xp = x2.reshape(mp_pad, PACK * din)          # PACK rows packed into lanes

    flat = _pack_kernel_params(params, weight_dtype)
    po = PACK * OUTPUT_DIM

    in_specs = [pl.BlockSpec((tm, PACK * din), lambda i: (i, 0))]
    in_specs += [pl.BlockSpec(a.shape, _replicated(a.ndim)) for a in flat]
    out_spec = pl.BlockSpec((tm, po), lambda i: (i, 0))

    out = pl.pallas_call(
        adain_kernel,
        out_shape=jax.ShapeDtypeStruct((mp_pad, po), jnp.float32),
        grid_spec=pltpu.PrefetchScalarGridSpec(
            num_scalar_prefetch=0,
            grid=(grid,),
            in_specs=in_specs,
            out_specs=out_spec,
        ),
        compiler_params=pltpu.CompilerParams(
            dimension_semantics=("parallel",),
            vmem_limit_bytes=32 << 20),
    )(xp, *flat)

    # Un-pack the lane-packed output on the wrapper side (cheap reshape).
    out = out.reshape(m_pad, OUTPUT_DIM)[:M]
    return out.reshape(B, N, OUTPUT_DIM)


# ---------------------------------------------------------------------------
# Pure-JAX reference for correctness checking (matches PyTorch semantics)
# ---------------------------------------------------------------------------
def reference_forward(x, params):
    B, N, _ = x.shape

    def mlp_relu(h, layers):
        for w, b in layers:
            h = jnp.maximum(h @ w + b, 0.0)
        return h

    # before-inject on ones
    y = jnp.ones((B, N, 5), jnp.float32)
    y = mlp_relu(y, params["before"])

    # inject
    h = mlp_relu(x, params["inject"][:-1])
    w, b = params["inject"][-1]
    sc = h @ w + b
    s = jnp.maximum(0.0, 1.0 + sc[..., 0:1])
    c = sc[..., 1:2]

    gamma, beta = params["ln"]
    mean = jnp.mean(y, axis=-1, keepdims=True)
    var = jnp.mean((y - mean) ** 2, axis=-1, keepdims=True)
    y = (y - mean) * jax.lax.rsqrt(var + LN_EPS) * gamma + beta

    h2 = s * y + c
    h2 = mlp_relu(h2, params["after"][:-1])
    w, b = params["after"][-1]
    return h2 @ w + b


if __name__ == "__main__":
    key = jax.random.PRNGKey(0)
    kp, kx = jax.random.split(key)

    params = init_params(kp)

    # 1000 rows -> 250 packed rows -> tm=64, grid=4 (2 steps per v7x TC).
    B, N = 2, 500
    x = jax.random.normal(kx, (B, N, INPUT_DIM), jnp.float32)

    ref = jax.block_until_ready(reference_forward(x, params))

    # Exact-structure check at f32 (lane packing / AdaIN fold / padding are exact).
    out_f32 = jax.block_until_ready(
        h_theta_adain_forward(x, params, weight_dtype=jnp.float32))
    assert out_f32.shape == (B, N, OUTPUT_DIM)
    assert jnp.allclose(out_f32, ref, rtol=1e-4, atol=1e-4), (
        float(jnp.max(jnp.abs(out_f32 - ref))))

    # Performance path: bf16 matmul operands, f32 accumulation + epilogue.
    out = jax.block_until_ready(h_theta_adain_forward(x, params))
    max_err = float(jnp.max(jnp.abs(out - ref)))
    rel_err = float(jnp.linalg.norm(out - ref) / jnp.linalg.norm(ref))
    assert out.shape == (B, N, OUTPUT_DIM)
    assert max_err < 8e-2 and rel_err < 3e-2, (max_err, rel_err)

    print("KERNEL_OK")
</pallas_src>

<mosaic_0001>
module attributes {stable_mosaic.version = 11 : i64} {
  func.func @adain_kernel(%arg0: i32, %arg1: memref<64x16xf32, #tpu.memory_space<vmem>>, %arg2: memref<16x256xf32, #tpu.memory_space<vmem>>, %arg3: memref<3x256x256xf32, #tpu.memory_space<vmem>>, %arg4: memref<256x8xf32, #tpu.memory_space<vmem>>, %arg5: memref<8x128xf32, #tpu.memory_space<vmem>>, %arg6: memref<4x128x128xf32, #tpu.memory_space<vmem>>, %arg7: memref<128x12xf32, #tpu.memory_space<vmem>>, %arg8: memref<11x256xf32, #tpu.memory_space<vmem>>, %arg9: memref<64x12xf32, #tpu.memory_space<vmem>>) attributes {dimension_semantics = [#tpu.dimension_semantics<parallel>], iteration_bounds = array<i64: 4>, scalar_prefetch = 0 : i64, scratch_operands = 0 : i64, tpu.core_type = #tpu.core_type<tc>, window_params = [{transform_indices = @transform_0, window_bounds = array<i64: 64, 16>}, {pipeline_mode = #tpu.pipeline_mode<synchronous>, transform_indices = @transform_1, window_bounds = array<i64: 16, 256>}, {pipeline_mode = #tpu.pipeline_mode<synchronous>, transform_indices = @transform_2, window_bounds = array<i64: 3, 256, 256>}, {pipeline_mode = #tpu.pipeline_mode<synchronous>, transform_indices = @transform_3, window_bounds = array<i64: 256, 8>}, {pipeline_mode = #tpu.pipeline_mode<synchronous>, transform_indices = @transform_4, window_bounds = array<i64: 8, 128>}, {pipeline_mode = #tpu.pipeline_mode<synchronous>, transform_indices = @transform_5, window_bounds = array<i64: 4, 128, 128>}, {pipeline_mode = #tpu.pipeline_mode<synchronous>, transform_indices = @transform_6, window_bounds = array<i64: 128, 12>}, {pipeline_mode = #tpu.pipeline_mode<synchronous>, transform_indices = @transform_7, window_bounds = array<i64: 11, 256>}, {transform_indices = @transform_8, window_bounds = array<i64: 64, 12>}]} {
    %c0 = arith.constant 0 : index
    %c0_0 = arith.constant 0 : index
    %0 = vector.load %arg1[%c0, %c0_0] : memref<64x16xf32, #tpu.memory_space<vmem>>, vector<64x16xf32>
    %c0_1 = arith.constant 0 : index
    %c0_2 = arith.constant 0 : index
    %1 = vector.load %arg2[%c0_1, %c0_2] : memref<16x256xf32, #tpu.memory_space<vmem>>, vector<16x256xf32>
    %cst = arith.constant dense<0.000000e+00> : vector<64x256xf32>
    %2 = tpu.matmul %0, %1, %cst {dimension_numbers = #tpu.dot_dimension_numbers<[1], [0], [0], [1], [0, 0, 1, 1], [], []>} : vector<64x16xf32>, vector<16x256xf32>, vector<64x256xf32> -> vector<64x256xf32>
    %c0_3 = arith.constant 0 : index
    %c0_4 = arith.constant 0 : index
    %3 = vector.load %arg8[%c0_3, %c0_4] : memref<11x256xf32, #tpu.memory_space<vmem>>, vector<1x256xf32>
    %4 = vector.broadcast %3 : vector<1x256xf32> to vector<64x256xf32>
    %5 = arith.addf %2, %4 : vector<64x256xf32>
    %cst_5 = arith.constant 0.000000e+00 : f32
    %6 = vector.broadcast %cst_5 : f32 to vector<64x256xf32>
    %7 = arith.maximumf %5, %6 : vector<64x256xf32>
    %c0_6 = arith.constant 0 : index
    %c0_7 = arith.constant 0 : index
    %c0_8 = arith.constant 0 : index
    %8 = vector.load %arg3[%c0_6, %c0_7, %c0_8] : memref<3x256x256xf32, #tpu.memory_space<vmem>>, vector<1x256x256xf32>
    %9 = vector.shape_cast %8 : vector<1x256x256xf32> to vector<256x256xf32>
    %cst_9 = arith.constant dense<0.000000e+00> : vector<64x256xf32>
    %10 = tpu.matmul %7, %9, %cst_9 {dimension_numbers = #tpu.dot_dimension_numbers<[1], [0], [0], [1], [0, 0, 1, 1], [], []>} : vector<64x256xf32>, vector<256x256xf32>, vector<64x256xf32> -> vector<64x256xf32>
    %c1 = arith.constant 1 : index
    %c0_10 = arith.constant 0 : index
    %11 = vector.load %arg8[%c1, %c0_10] : memref<11x256xf32, #tpu.memory_space<vmem>>, vector<1x256xf32>
    %12 = vector.broadcast %11 : vector<1x256xf32> to vector<64x256xf32>
    %13 = arith.addf %10, %12 : vector<64x256xf32>
    %cst_11 = arith.constant 0.000000e+00 : f32
    %14 = vector.broadcast %cst_11 : f32 to vector<64x256xf32>
    %15 = arith.maximumf %13, %14 : vector<64x256xf32>
    %c1_12 = arith.constant 1 : index
    %c0_13 = arith.constant 0 : index
    %c0_14 = arith.constant 0 : index
    %16 = vector.load %arg3[%c1_12, %c0_13, %c0_14] : memref<3x256x256xf32, #tpu.memory_space<vmem>>, vector<1x256x256xf32>
    %17 = vector.shape_cast %16 : vector<1x256x256xf32> to vector<256x256xf32>
    %cst_15 = arith.constant dense<0.000000e+00> : vector<64x256xf32>
    %18 = tpu.matmul %15, %17, %cst_15 {dimension_numbers = #tpu.dot_dimension_numbers<[1], [0], [0], [1], [0, 0, 1, 1], [], []>} : vector<64x256xf32>, vector<256x256xf32>, vector<64x256xf32> -> vector<64x256xf32>
    %c2 = arith.constant 2 : index
    %c0_16 = arith.constant 0 : index
    %19 = vector.load %arg8[%c2, %c0_16] : memref<11x256xf32, #tpu.memory_space<vmem>>, vector<1x256xf32>
    %20 = vector.broadcast %19 : vector<1x256xf32> to vector<64x256xf32>
    %21 = arith.addf %18, %20 : vector<64x256xf32>
    %cst_17 = arith.constant 0.000000e+00 : f32
    %22 = vector.broadcast %cst_17 : f32 to vector<64x256xf32>
    %23 = arith.maximumf %21, %22 : vector<64x256xf32>
    %c2_18 = arith.constant 2 : index
    %c0_19 = arith.constant 0 : index
    %c0_20 = arith.constant 0 : index
    %24 = vector.load %arg3[%c2_18, %c0_19, %c0_20] : memref<3x256x256xf32, #tpu.memory_space<vmem>>, vector<1x256x256xf32>
    %25 = vector.shape_cast %24 : vector<1x256x256xf32> to vector<256x256xf32>
    %cst_21 = arith.constant dense<0.000000e+00> : vector<64x256xf32>
    %26 = tpu.matmul %23, %25, %cst_21 {dimension_numbers = #tpu.dot_dimension_numbers<[1], [0], [0], [1], [0, 0, 1, 1], [], []>} : vector<64x256xf32>, vector<256x256xf32>, vector<64x256xf32> -> vector<64x256xf32>
    %c3 = arith.constant 3 : index
    %c0_22 = arith.constant 0 : index
    %27 = vector.load %arg8[%c3, %c0_22] : memref<11x256xf32, #tpu.memory_space<vmem>>, vector<1x256xf32>
    %28 = vector.broadcast %27 : vector<1x256xf32> to vector<64x256xf32>
    %29 = arith.addf %26, %28 : vector<64x256xf32>
    %cst_23 = arith.constant 0.000000e+00 : f32
    %30 = vector.broadcast %cst_23 : f32 to vector<64x256xf32>
    %31 = arith.maximumf %29, %30 : vector<64x256xf32>
    %c0_24 = arith.constant 0 : index
    %c0_25 = arith.constant 0 : index
    %32 = vector.load %arg4[%c0_24, %c0_25] : memref<256x8xf32, #tpu.memory_space<vmem>>, vector<256x8xf32>
    %cst_26 = arith.constant dense<0.000000e+00> : vector<64x8xf32>
    %33 = tpu.matmul %31, %32, %cst_26 {dimension_numbers = #tpu.dot_dimension_numbers<[1], [0], [0], [1], [0, 0, 1, 1], [], []>} : vector<64x256xf32>, vector<256x8xf32>, vector<64x8xf32> -> vector<64x8xf32>
    %c4 = arith.constant 4 : index
    %c0_27 = arith.constant 0 : index
    %34 = vector.load %arg8[%c4, %c0_27] : memref<11x256xf32, #tpu.memory_space<vmem>>, vector<1x256xf32>
    %35 = vector.extract_strided_slice %34 {offsets = [0, 0], sizes = [1, 8], strides = [1, 1]} : vector<1x256xf32> to vector<1x8xf32>
    %36 = vector.broadcast %35 : vector<1x8xf32> to vector<64x8xf32>
    %37 = arith.addf %33, %36 : vector<64x8xf32>
    %38 = tpu.iota {dimensions = array<i32: 1>} : vector<64x8xi32>
    %c2_i32 = arith.constant 2 : i32
    %c0_i32 = arith.constant 0 : i32
    %39 = arith.cmpi eq, %c2_i32, %c0_i32 : i32
    %c1_i32 = arith.constant 1 : i32
    %40 = arith.select %39, %c1_i32, %c2_i32 : i32
    %41 = vector.broadcast %40 : i32 to vector<64x8xi32>
    %42 = arith.remsi %38, %41 : vector<64x8xi32>
    %c0_i32_28 = arith.constant 0 : i32
    %43 = vector.broadcast %c0_i32_28 : i32 to vector<64x8xi32>
    %44 = arith.cmpi ne, %42, %43 : vector<64x8xi32>
    %c0_i32_29 = arith.constant 0 : i32
    %45 = vector.broadcast %c0_i32_29 : i32 to vector<64x8xi32>
    %46 = arith.cmpi slt, %42, %45 : vector<64x8xi32>
    %c0_i32_30 = arith.constant 0 : i32
    %47 = arith.cmpi slt, %40, %c0_i32_30 : i32
    %48 = vector.broadcast %47 : i1 to vector<64x8xi1>
    %49 = vector.broadcast %48 : vector<64x8xi1> to vector<64x8xi1>
    %50 = arith.xori %46, %49 : vector<64x8xi1>
    %51 = arith.andi %50, %44 : vector<64x8xi1>
    %52 = vector.broadcast %40 : i32 to vector<64x8xi32>
    %53 = arith.addi %42, %52 : vector<64x8xi32>
    %54 = arith.select %51, %53, %42 : vector<64x8xi1>, vector<64x8xi32>
    %c0_i32_31 = arith.constant 0 : i32
    %55 = vector.broadcast %c0_i32_31 : i32 to vector<64x8xi32>
    %56 = arith.cmpi eq, %54, %55 : vector<64x8xi32>
    %cst_32 = arith.constant 1.000000e+00 : f32
    %57 = vector.broadcast %cst_32 : f32 to vector<64x8xf32>
    %58 = arith.addf %57, %37 : vector<64x8xf32>
    %cst_33 = arith.constant 0.000000e+00 : f32
    %59 = vector.broadcast %cst_33 : f32 to vector<64x8xf32>
    %60 = arith.maximumf %58, %59 : vector<64x8xf32>
    %61 = arith.select %56, %60, %37 : vector<64x8xi1>, vector<64x8xf32>
    %c0_34 = arith.constant 0 : index
    %c0_35 = arith.constant 0 : index
    %62 = vector.load %arg5[%c0_34, %c0_35] : memref<8x128xf32, #tpu.memory_space<vmem>>, vector<8x128xf32>
    %cst_36 = arith.constant dense<0.000000e+00> : vector<64x128xf32>
    %63 = tpu.matmul %61, %62, %cst_36 {dimension_numbers = #tpu.dot_dimension_numbers<[1], [0], [0], [1], [0, 0, 1, 1], [], []>} : vector<64x8xf32>, vector<8x128xf32>, vector<64x128xf32> -> vector<64x128xf32>
    %c5 = arith.constant 5 : index
    %c0_37 = arith.constant 0 : index
    %64 = vector.load %arg8[%c5, %c0_37] : memref<11x256xf32, #tpu.memory_space<vmem>>, vector<1x256xf32>
    %65 = vector.extract_strided_slice %64 {offsets = [0, 0], sizes = [1, 128], strides = [1, 1]} : vector<1x256xf32> to vector<1x128xf32>
    %66 = vector.broadcast %65 : vector<1x128xf32> to vector<64x128xf32>
    %67 = arith.addf %63, %66 : vector<64x128xf32>
    %cst_38 = arith.constant 0.000000e+00 : f32
    %68 = vector.broadcast %cst_38 : f32 to vector<64x128xf32>
    %69 = arith.maximumf %67, %68 : vector<64x128xf32>
    %c0_39 = arith.constant 0 : index
    %c0_40 = arith.constant 0 : index
    %c0_41 = arith.constant 0 : index
    %70 = vector.load %arg6[%c0_39, %c0_40, %c0_41] : memref<4x128x128xf32, #tpu.memory_space<vmem>>, vector<1x128x128xf32>
    %71 = vector.shape_cast %70 : vector<1x128x128xf32> to vector<128x128xf32>
    %cst_42 = arith.constant dense<0.000000e+00> : vector<64x128xf32>
    %72 = tpu.matmul %69, %71, %cst_42 {dimension_numbers = #tpu.dot_dimension_numbers<[1], [0], [0], [1], [0, 0, 1, 1], [], []>} : vector<64x128xf32>, vector<128x128xf32>, vector<64x128xf32> -> vector<64x128xf32>
    %c6 = arith.constant 6 : index
    %c0_43 = arith.constant 0 : index
    %73 = vector.load %arg8[%c6, %c0_43] : memref<11x256xf32, #tpu.memory_space<vmem>>, vector<1x256xf32>
    %74 = vector.extract_strided_slice %73 {offsets = [0, 0], sizes = [1, 128], strides = [1, 1]} : vector<1x256xf32> to vector<1x128xf32>
    %75 = vector.broadcast %74 : vector<1x128xf32> to vector<64x128xf32>
    %76 = arith.addf %72, %75 : vector<64x128xf32>
    %cst_44 = arith.constant 0.000000e+00 : f32
    %77 = vector.broadcast %cst_44 : f32 to vector<64x128xf32>
    %78 = arith.maximumf %76, %77 : vector<64x128xf32>
    %c1_45 = arith.constant 1 : index
    %c0_46 = arith.constant 0 : index
    %c0_47 = arith.constant 0 : index
    %79 = vector.load %arg6[%c1_45, %c0_46, %c0_47] : memref<4x128x128xf32, #tpu.memory_space<vmem>>, vector<1x128x128xf32>
    %80 = vector.shape_cast %79 : vector<1x128x128xf32> to vector<128x128xf32>
    %cst_48 = arith.constant dense<0.000000e+00> : vector<64x128xf32>
    %81 = tpu.matmul %78, %80, %cst_48 {dimension_numbers = #tpu.dot_dimension_numbers<[1], [0], [0], [1], [0, 0, 1, 1], [], []>} : vector<64x128xf32>, vector<128x128xf32>, vector<64x128xf32> -> vector<64x128xf32>
    %c7 = arith.constant 7 : index
    %c0_49 = arith.constant 0 : index
    %82 = vector.load %arg8[%c7, %c0_49] : memref<11x256xf32, #tpu.memory_space<vmem>>, vector<1x256xf32>
    %83 = vector.extract_strided_slice %82 {offsets = [0, 0], sizes = [1, 128], strides = [1, 1]} : vector<1x256xf32> to vector<1x128xf32>
    %84 = vector.broadcast %83 : vector<1x128xf32> to vector<64x128xf32>
    %85 = arith.addf %81, %84 : vector<64x128xf32>
    %cst_50 = arith.constant 0.000000e+00 : f32
    %86 = vector.broadcast %cst_50 : f32 to vector<64x128xf32>
    %87 = arith.maximumf %85, %86 : vector<64x128xf32>
    %c2_51 = arith.constant 2 : index
    %c0_52 = arith.constant 0 : index
    %c0_53 = arith.constant 0 : index
    %88 = vector.load %arg6[%c2_51, %c0_52, %c0_53] : memref<4x128x128xf32, #tpu.memory_space<vmem>>, vector<1x128x128xf32>
    %89 = vector.shape_cast %88 : vector<1x128x128xf32> to vector<128x128xf32>
    %cst_54 = arith.constant dense<0.000000e+00> : vector<64x128xf32>
    %90 = tpu.matmul %87, %89, %cst_54 {dimension_numbers = #tpu.dot_dimension_numbers<[1], [0], [0], [1], [0, 0, 1, 1], [], []>} : vector<64x128xf32>, vector<128x128xf32>, vector<64x128xf32> -> vector<64x128xf32>
    %c8 = arith.constant 8 : index
    %c0_55 = arith.constant 0 : index
    %91 = vector.load %arg8[%c8, %c0_55] : memref<11x256xf32, #tpu.memory_space<vmem>>, vector<1x256xf32>
    %92 = vector.extract_strided_slice %91 {offsets = [0, 0], sizes = [1, 128], strides = [1, 1]} : vector<1x256xf32> to vector<1x128xf32>
    %93 = vector.broadcast %92 : vector<1x128xf32> to vector<64x128xf32>
    %94 = arith.addf %90, %93 : vector<64x128xf32>
    %cst_56 = arith.constant 0.000000e+00 : f32
    %95 = vector.broadcast %cst_56 : f32 to vector<64x128xf32>
    %96 = arith.maximumf %94, %95 : vector<64x128xf32>
    %c3_57 = arith.constant 3 : index
    %c0_58 = arith.constant 0 : index
    %c0_59 = arith.constant 0 : index
    %97 = vector.load %arg6[%c3_57, %c0_58, %c0_59] : memref<4x128x128xf32, #tpu.memory_space<vmem>>, vector<1x128x128xf32>
    %98 = vector.shape_cast %97 : vector<1x128x128xf32> to vector<128x128xf32>
    %cst_60 = arith.constant dense<0.000000e+00> : vector<64x128xf32>
    %99 = tpu.matmul %96, %98, %cst_60 {dimension_numbers = #tpu.dot_dimension_numbers<[1], [0], [0], [1], [0, 0, 1, 1], [], []>} : vector<64x128xf32>, vector<128x128xf32>, vector<64x128xf32> -> vector<64x128xf32>
    %c9 = arith.constant 9 : index
    %c0_61 = arith.constant 0 : index
    %100 = vector.load %arg8[%c9, %c0_61] : memref<11x256xf32, #tpu.memory_space<vmem>>, vector<1x256xf32>
    %101 = vector.extract_strided_slice %100 {offsets = [0, 0], sizes = [1, 128], strides = [1, 1]} : vector<1x256xf32> to vector<1x128xf32>
    %102 = vector.broadcast %101 : vector<1x128xf32> to vector<64x128xf32>
    %103 = arith.addf %99, %102 : vector<64x128xf32>
    %cst_62 = arith.constant 0.000000e+00 : f32
    %104 = vector.broadcast %cst_62 : f32 to vector<64x128xf32>
    %105 = arith.maximumf %103, %104 : vector<64x128xf32>
    %c0_63 = arith.constant 0 : index
    %c0_64 = arith.constant 0 : index
    %106 = vector.load %arg7[%c0_63, %c0_64] : memref<128x12xf32, #tpu.memory_space<vmem>>, vector<128x12xf32>
    %cst_65 = arith.constant dense<0.000000e+00> : vector<64x12xf32>
    %107 = tpu.matmul %105, %106, %cst_65 {dimension_numbers = #tpu.dot_dimension_numbers<[1], [0], [0], [1], [0, 0, 1, 1], [], []>} : vector<64x128xf32>, vector<128x12xf32>, vector<64x12xf32> -> vector<64x12xf32>
    %c10 = arith.constant 10 : index
    %c0_66 = arith.constant 0 : index
    %108 = vector.load %arg8[%c10, %c0_66] : memref<11x256xf32, #tpu.memory_space<vmem>>, vector<1x256xf32>
    %109 = vector.extract_strided_slice %108 {offsets = [0, 0], sizes = [1, 12], strides = [1, 1]} : vector<1x256xf32> to vector<1x12xf32>
    %110 = vector.broadcast %109 : vector<1x12xf32> to vector<64x12xf32>
    %111 = arith.addf %107, %110 : vector<64x12xf32>
    %c0_67 = arith.constant 0 : index
    %c0_68 = arith.constant 0 : index
    %112 = vector.load %arg9[%c0_67, %c0_68] : memref<64x12xf32, #tpu.memory_space<vmem>>, vector<64x12xf32>
    tpu.vector_store %arg9[%c0_67, %c0_68], %111 {strides = array<i32>} : memref<64x12xf32, #tpu.memory_space<vmem>>, vector<64x12xf32>,
    return
  }
  func.func @transform_0(%arg0: i32) -> (i32, i32) {
    %c0_i32 = arith.constant 0 : i32
    %c0_i32_0 = arith.constant 0 : i32
    return %arg0, %c0_i32 : i32, i32
  }
  func.func @transform_1(%arg0: i32) -> (i32, i32) {
    %c0_i32 = arith.constant 0 : i32
    %c0_i32_0 = arith.constant 0 : i32
    %c0_i32_1 = arith.constant 0 : i32
    return %c0_i32, %c0_i32_0 : i32, i32
  }
  func.func @transform_2(%arg0: i32) -> (i32, i32, i32) {
    %c0_i32 = arith.constant 0 : i32
    %c0_i32_0 = arith.constant 0 : i32
    %c0_i32_1 = arith.constant 0 : i32
    %c0_i32_2 = arith.constant 0 : i32
    return %c0_i32, %c0_i32_0, %c0_i32_1 : i32, i32, i32
  }
  func.func @transform_3(%arg0: i32) -> (i32, i32) {
    %c0_i32 = arith.constant 0 : i32
    %c0_i32_0 = arith.constant 0 : i32
    %c0_i32_1 = arith.constant 0 : i32
    return %c0_i32, %c0_i32_0 : i32, i32
  }
  func.func @transform_4(%arg0: i32) -> (i32, i32) {
    %c0_i32 = arith.constant 0 : i32
    %c0_i32_0 = arith.constant 0 : i32
    %c0_i32_1 = arith.constant 0 : i32
    return %c0_i32, %c0_i32_0 : i32, i32
  }
  func.func @transform_5(%arg0: i32) -> (i32, i32, i32) {
    %c0_i32 = arith.constant 0 : i32
    %c0_i32_0 = arith.constant 0 : i32
    %c0_i32_1 = arith.constant 0 : i32
    %c0_i32_2 = arith.constant 0 : i32
    return %c0_i32, %c0_i32_0, %c0_i32_1 : i32, i32, i32
  }
  func.func @transform_6(%arg0: i32) -> (i32, i32) {
    %c0_i32 = arith.constant 0 : i32
    %c0_i32_0 = arith.constant 0 : i32
    %c0_i32_1 = arith.constant 0 : i32
    return %c0_i32, %c0_i32_0 : i32, i32
  }
  func.func @transform_7(%arg0: i32) -> (i32, i32) {
    %c0_i32 = arith.constant 0 : i32
    %c0_i32_0 = arith.constant 0 : i32
    %c0_i32_1 = arith.constant 0 : i32
    return %c0_i32, %c0_i32_0 : i32, i32
  }
  func.func @transform_8(%arg0: i32) -> (i32, i32) {
    %c0_i32 = arith.constant 0 : i32
    %c0_i32_0 = arith.constant 0 : i32
    return %arg0, %c0_i32 : i32, i32
  }
}

</mosaic_0001>

<llo_original>
// kernel: tile.58
$region0: #{tile.58}
  #allocation0 [shape = 's32[1]{0}', space=sflag, size = 0x4, scoped, tag = 'scoped memory for tile.58']
  %s0 = inlined_call_operand.vmem [shape: f32[64], index: 0, kind: input, shape index: {}]
  %s1 = inlined_call_operand.vmem [shape: f32[4,64], index: 1, kind: output, shape index: {}]
  // Predicated region
  $region2: #{tile.58} parent=0 // pred_check
    _
  $region3: #{tile.58} parent=0 // pred_check_branch
    %3 = sbr.rel (0) target = $region5
  $region4: #{tile.58} parent=0 // pred_region
    _
  $region5: #{tile.58} parent=0 // pred_fallthru
    _
  %v4 = vld [vmem:[%s0] ss:$0 sm:$0xff]
  %5 = vst [vmem:[%s1] sm:$0xf] %v4

// kernel: tile.78
$region0: #{tile.78}
  #allocation0 [shape = 's32[1]{0}', space=sflag, size = 0x4, scoped, tag = 'scoped memory for tile.78']
  %s0 = inlined_call_operand.vmem [shape: f32[2], index: 0, kind: input, shape index: {}]
  %s1 = inlined_call_operand.vmem [shape: f32[4,2], index: 1, kind: output, shape index: {}]
  // Predicated region
  $region2: #{tile.78} parent=0 // pred_check
    _
  $region3: #{tile.78} parent=0 // pred_check_branch
    %3 = sbr.rel (0) target = $region5
  $region4: #{tile.78} parent=0 // pred_region
    _
  $region5: #{tile.78} parent=0 // pred_fallthru
    _
  %v4 = vld [vmem:[%s0] ss:$0 sm:$0xff]
  %5 = vst [vmem:[%s1] sm:$0xf] %v4

// kernel: tile.83
$region0: #{tile.83}
  #allocation0 [shape = 's32[1]{0}', space=sflag, size = 0x4, scoped, tag = 'scoped memory for tile.83']
  %s0 = inlined_call_operand.vmem [shape: f32[32], index: 0, kind: input, shape index: {}]
  %s1 = inlined_call_operand.vmem [shape: f32[4,32], index: 1, kind: output, shape index: {}]
  // Predicated region
  $region2: #{tile.83} parent=0 // pred_check
    _
  $region3: #{tile.83} parent=0 // pred_check_branch
    %3 = sbr.rel (0) target = $region5
  $region4: #{tile.83} parent=0 // pred_region
    _
  $region5: #{tile.83} parent=0 // pred_fallthru
    _
  %v4 = vld [vmem:[%s0] ss:$0 sm:$0xff]
  %5 = vst [vmem:[%s1] sm:$0xf] %v4

// kernel: tile.108
$region0: #{tile.108}
  #allocation0 [shape = 's32[1]{0}', space=sflag, size = 0x4, scoped, tag = 'scoped memory for tile.108']
  %s0 = inlined_call_operand.vmem [shape: f32[3], index: 0, kind: input, shape index: {}]
  %s1 = inlined_call_operand.vmem [shape: f32[4,3], index: 1, kind: output, shape index: {}]
  // Predicated region
  $region2: #{tile.108} parent=0 // pred_check
    _
  $region3: #{tile.108} parent=0 // pred_check_branch
    %3 = sbr.rel (0) target = $region5
  $region4: #{tile.108} parent=0 // pred_region
    _
  $region5: #{tile.108} parent=0 // pred_fallthru
    _
  %v4 = vld [vmem:[%s0] ss:$0 sm:$0xff]
  %5 = vst [vmem:[%s1] sm:$0xf] %v4

// kernel: h_theta_adain_forward.1
$region0: #{h_theta_adain_forward.1}
  #allocation0 [shape = 'u32[]', space=smem, size = 0x4, offset = 0x4, fixed_abs, tag = 'smem constant byte address 0x4 - core index']
  #allocation1 [shape = 'u32[144,128]{1,0:T(1,128)}', space=vmem, size = 0x12000, scoped, tag = 'internal scratch']
  %s0 = inlined_call_operand.vmem [shape: f32[256,16], index: 0, kind: input, shape index: {}]
  %s1 = inlined_call_operand.vmem [shape: f32[16,256], index: 1, kind: input, shape index: {}]
  %s2 = inlined_call_operand.vmem [shape: f32[3,256,256], index: 2, kind: input, shape index: {}]
  %s3 = inlined_call_operand.vmem [shape: f32[256,8], index: 3, kind: input, shape index: {}]
  %s4 = inlined_call_operand.vmem [shape: f32[8,128], index: 4, kind: input, shape index: {}]
  %s5 = inlined_call_operand.vmem [shape: f32[4,128,128], index: 5, kind: input, shape index: {}]
  %s6 = inlined_call_operand.vmem [shape: f32[128,12], index: 6, kind: input, shape index: {}]
  %s7 = inlined_call_operand.vmem [shape: f32[11,256], index: 7, kind: input, shape index: {}]
  %s8 = inlined_call_operand.vmem [shape: f32[256,12], index: 8, kind: output, shape index: {}]
  %s9 = sld [smem:[#allocation0]]
  $region65: #{h_theta_adain_forward.1} parent=0
    _
  %s11 = ssub.s32 1, %s9
  %s12 = scalar_select 0, %s11, %s9
  loop: start=0, step=1, limit=6
  $region2: #{h_theta_adain_forward.1} parent=0 // loop_pre_header
    _
  $region3: #{h_theta_adain_forward.1} parent=0 // loop_header
    %s14 = sphi 0, %s18
    %p15 = scmp.ge.s32.totalorder %s14, 6
    %s24 = sphi 0, %s26
    %s27 = sphi 0, %s24
    %s28 = sphi 0, %s27
    %s44 = sphi 0, %s28
    %s48 = sphi 0, %s48
    %s50 = sphi 0, %s48
    %s51 = sphi 0, %s50
    %s65 = sphi 0, %s51
    %s69 = sphi 0, %s69
    %s71 = sphi 0, %s69
    %s72 = sphi 0, %s71
    %s86 = sphi 0, %s72
    %s90 = sphi 0, %s90
    %s92 = sphi 0, %s90
    %s93 = sphi 0, %s92
    %s107 = sphi 0, %s93
    %s111 = sphi 0, %s111
    %s113 = sphi 0, %s111
    %s114 = sphi 0, %s113
    %s128 = sphi 0, %s114
    %s132 = sphi 0, %s132
    %s134 = sphi 0, %s132
    %s135 = sphi 0, %s134
    %s149 = sphi 0, %s135
    %s153 = sphi 0, %s153
    %s155 = sphi 0, %s153
    %s156 = sphi 0, %s155
    %s170 = sphi 0, %s156
    %s174 = sphi 0, %s174
    %s176 = sphi 0, %s174
    %s177 = sphi 0, %s176
    %s191 = sphi 0, %s177
    %s197 = sphi 0, %s199
    %s200 = sphi 0, %s197
    %s201 = sphi 0, %s200
    %s217 = sphi 0, %s201
  $region4: #{h_theta_adain_forward.1} parent=0 // loop_header_branch
    %17 = sbr.rel (%p15) target = $region8
  $region5: #{h_theta_adain_forward.1} parent=0 // loop_body
    %s19 = ssub.s32 %s14, 1
    %s20 = ssub.s32 %s14, 2
    %s21 = sadd.s32 %s14, 1
    %s22 = ssub.s32 %s14, %s21
    %p23 = scmp.eq.s32.totalorder %s22, 0
    %s25 = sadd.s32 %s24, 1
    %s26 = scalar_select %p23, %s24, %s25
    %p29 = pneg %p23
    %p30 = scmp.eq.s32.totalorder %s14, 3
    %p31 = por %p29, %p30
    %p32 = scmp.ne.s32.totalorder %s24, %s27
    %p33 = scmp.eq.s32.totalorder %s14, 0
    %p34 = por %p32, %p33
    %p35 = scmp.ne.s32.totalorder %s24, %s27
    %p36 = scmp.eq.s32.totalorder %s19, 3
    %p37 = por %p35, %p36
    %p38 = scmp.ne.s32.totalorder %s27, %s28
    %p39 = scmp.eq.s32.totalorder %s19, 0
    %p40 = por %p38, %p39
    %p41 = scmp.ne.s32.totalorder %s27, %s28
    %p42 = scmp.eq.s32.totalorder %s20, 3
    %p43 = por %p41, %p42
    %p45 = scmp.ne.s32.totalorder %s28, %s44
    %p46 = scmp.eq.s32.totalorder %s20, 0
    %p47 = por %p45, %p46
    %s49 = sadd.s32 %s48, 1
    %p52 = scmp.eq.s32.totalorder %s14, 3
    %p53 = scmp.ne.s32.totalorder %s48, %s50
    %p54 = scmp.eq.s32.totalorder %s14, 0
    %p55 = por %p53, %p54
    %p56 = scmp.ne.s32.totalorder %s48, %s50
    %p57 = scmp.eq.s32.totalorder %s19, 3
    %p58 = por %p56, %p57
    %p59 = scmp.ne.s32.totalorder %s50, %s51
    %p60 = scmp.eq.s32.totalorder %s19, 0
    %p61 = por %p59, %p60
    %p62 = scmp.ne.s32.totalorder %s50, %s51
    %p63 = scmp.eq.s32.totalorder %s20, 3
    %p64 = por %p62, %p63
    %p66 = scmp.ne.s32.totalorder %s51, %s65
    %p67 = scmp.eq.s32.totalorder %s20, 0
    %p68 = por %p66, %p67
    %s70 = sadd.s32 %s69, 1
    %p73 = scmp.eq.s32.totalorder %s14, 3
    %p74 = scmp.ne.s32.totalorder %s69, %s71
    %p75 = scmp.eq.s32.totalorder %s14, 0
    %p76 = por %p74, %p75
    %p77 = scmp.ne.s32.totalorder %s69, %s71
    %p78 = scmp.eq.s32.totalorder %s19, 3
    %p79 = por %p77, %p78
    %p80 = scmp.ne.s32.totalorder %s71, %s72
    %p81 = scmp.eq.s32.totalorder %s19, 0
    %p82 = por %p80, %p81
    %p83 = scmp.ne.s32.totalorder %s71, %s72
    %p84 = scmp.eq.s32.totalorder %s20, 3
    %p85 = por %p83, %p84
    %p87 = scmp.ne.s32.totalorder %s72, %s86
    %p88 = scmp.eq.s32.totalorder %s20, 0
    %p89 = por %p87, %p88
    %s91 = sadd.s32 %s90, 1
    %p94 = scmp.eq.s32.totalorder %s14, 3
    %p95 = scmp.ne.s32.totalorder %s90, %s92
    %p96 = scmp.eq.s32.totalorder %s14, 0
    %p97 = por %p95, %p96
    %p98 = scmp.ne.s32.totalorder %s90, %s92
    %p99 = scmp.eq.s32.totalorder %s19, 3
    %p100 = por %p98, %p99
    %p101 = scmp.ne.s32.totalorder %s92, %s93
    %p102 = scmp.eq.s32.totalorder %s19, 0
    %p103 = por %p101, %p102
    %p104 = scmp.ne.s32.totalorder %s92, %s93
    %p105 = scmp.eq.s32.totalorder %s20, 3
    %p106 = por %p104, %p105
    %p108 = scmp.ne.s32.totalorder %s93, %s107
    %p109 = scmp.eq.s32.totalorder %s20, 0
    %p110 = por %p108, %p109
    %s112 = sadd.s32 %s111, 1
    %p115 = scmp.eq.s32.totalorder %s14, 3
    %p116 = scmp.ne.s32.totalorder %s111, %s113
    %p117 = scmp.eq.s32.totalorder %s14, 0
    %p118 = por %p116, %p117
    %p119 = scmp.ne.s32.totalorder %s111, %s113
    %p120 = scmp.eq.s32.totalorder %s19, 3
    %p121 = por %p119, %p120
    %p122 = scmp.ne.s32.totalorder %s113, %s114
    %p123 = scmp.eq.s32.totalorder %s19, 0
    %p124 = por %p122, %p123
    %p125 = scmp.ne.s32.totalorder %s113, %s114
    %p126 = scmp.eq.s32.totalorder %s20, 3
    %p127 = por %p125, %p126
    %p129 = scmp.ne.s32.totalorder %s114, %s128
    %p130 = scmp.eq.s32.totalorder %s20, 0
    %p131 = por %p129, %p130
    %s133 = sadd.s32 %s132, 1
    %p136 = scmp.eq.s32.totalorder %s14, 3
    %p137 = scmp.ne.s32.totalorder %s132, %s134
    %p138 = scmp.eq.s32.totalorder %s14, 0
    %p139 = por %p137, %p138
    %p140 = scmp.ne.s32.totalorder %s132, %s134
    %p141 = scmp.eq.s32.totalorder %s19, 3
    %p142 = por %p140, %p141
    %p143 = scmp.ne.s32.totalorder %s134, %s135
    %p144 = scmp.eq.s32.totalorder %s19, 0
    %p145 = por %p143, %p144
    %p146 = scmp.ne.s32.totalorder %s134, %s135
    %p147 = scmp.eq.s32.totalorder %s20, 3
    %p148 = por %p146, %p147
    %p150 = scmp.ne.s32.totalorder %s135, %s149
    %p151 = scmp.eq.s32.totalorder %s20, 0
    %p152 = por %p150, %p151
    %s154 = sadd.s32 %s153, 1
    %p157 = scmp.eq.s32.totalorder %s14, 3
    %p158 = scmp.ne.s32.totalorder %s153, %s155
    %p159 = scmp.eq.s32.totalorder %s14, 0
    %p160 = por %p158, %p159
    %p161 = scmp.ne.s32.totalorder %s153, %s155
    %p162 = scmp.eq.s32.totalorder %s19, 3
    %p163 = por %p161, %p162
    %p164 = scmp.ne.s32.totalorder %s155, %s156
    %p165 = scmp.eq.s32.totalorder %s19, 0
    %p166 = por %p164, %p165
    %p167 = scmp.ne.s32.totalorder %s155, %s156
    %p168 = scmp.eq.s32.totalorder %s20, 3
    %p169 = por %p167, %p168
    %p171 = scmp.ne.s32.totalorder %s156, %s170
    %p172 = scmp.eq.s32.totalorder %s20, 0
    %p173 = por %p171, %p172
    %s175 = sadd.s32 %s174, 1
    %p178 = scmp.eq.s32.totalorder %s14, 3
    %p179 = scmp.ne.s32.totalorder %s174, %s176
    %p180 = scmp.eq.s32.totalorder %s14, 0
    %p181 = por %p179, %p180
    %p182 = scmp.ne.s32.totalorder %s174, %s176
    %p183 = scmp.eq.s32.totalorder %s19, 3
    %p184 = por %p182, %p183
    %p185 = scmp.ne.s32.totalorder %s176, %s177
    %p186 = scmp.eq.s32.totalorder %s19, 0
    %p187 = por %p185, %p186
    %p188 = scmp.ne.s32.totalorder %s176, %s177
    %p189 = scmp.eq.s32.totalorder %s20, 3
    %p190 = por %p188, %p189
    %p192 = scmp.ne.s32.totalorder %s177, %s191
    %p193 = scmp.eq.s32.totalorder %s20, 0
    %p194 = por %p192, %p193
    %s195 = ssub.s32 %s14, %s21
    %p196 = scmp.eq.s32.totalorder %s195, 0
    %s198 = sadd.s32 %s197, 1
    %s199 = scalar_select %p196, %s197, %s198
    %p202 = pneg %p196
    %p203 = scmp.eq.s32.totalorder %s14, 3
    %p204 = por %p202, %p203
    %p205 = scmp.ne.s32.totalorder %s197, %s200
    %p206 = scmp.eq.s32.totalorder %s14, 0
    %p207 = por %p205, %p206
    %p208 = scmp.ne.s32.totalorder %s197, %s200
    %p209 = scmp.eq.s32.totalorder %s19, 3
    %p210 = por %p208, %p209
    %p211 = scmp.ne.s32.totalorder %s200, %s201
    %p212 = scmp.eq.s32.totalorder %s19, 0
    %p213 = por %p211, %p212
    %p214 = scmp.ne.s32.totalorder %s200, %s201
    %p215 = scmp.eq.s32.totalorder %s20, 3
    %p216 = por %p214, %p215
    %p218 = scmp.ne.s32.totalorder %s201, %s217
    %p219 = scmp.eq.s32.totalorder %s20, 0
    %p220 = por %p218, %p219
    %p221 = scmp.le.s32.totalorder 1, %s14
    %p222 = scmp.lt.s32.totalorder %s14, 5
    %p223 = pnand %p221, %p222
    %p224 = pneg %p223
    // Predicated region
    $region9: #{h_theta_adain_forward.1} parent=5 // pred_check
      _
    $region10: #{h_theta_adain_forward.1} parent=5 // pred_check_branch
      %226 = sbr.rel (%p223) target = $region12
    $region11: #{h_theta_adain_forward.1} parent=5 // pred_region
      %s227 = ssub.s32 %s14, 1
      // Predicated region
      $region13: #{h_theta_adain_forward.1} parent=11 // pred_check
        %p228 = pneg %p61
      $region14: #{h_theta_adain_forward.1} parent=11 // pred_check_branch
        %230 = sbr.rel (%p228) target = $region16
      $region15: #{h_theta_adain_forward.1} parent=11 // pred_region
        _
      $region16: #{h_theta_adain_forward.1} parent=11 // pred_fallthru
        _
      // Predicated region
      $region17: #{h_theta_adain_forward.1} parent=11 // pred_check
        %p231 = pneg %p82
      $region18: #{h_theta_adain_forward.1} parent=11 // pred_check_branch
        %233 = sbr.rel (%p231) target = $region20
      $region19: #{h_theta_adain_forward.1} parent=11 // pred_region
        _
      $region20: #{h_theta_adain_forward.1} parent=11 // pred_fallthru
        _
      // Predicated region
      $region21: #{h_theta_adain_forward.1} parent=11 // pred_check
        %p234 = pneg %p103
      $region22: #{h_theta_adain_forward.1} parent=11 // pred_check_branch
        %236 = sbr.rel (%p234) target = $region24
      $region23: #{h_theta_adain_forward.1} parent=11 // pred_region
        _
      $region24: #{h_theta_adain_forward.1} parent=11 // pred_fallthru
        _
      // Predicated region
      $region25: #{h_theta_adain_forward.1} parent=11 // pred_check
        %p237 = pneg %p124
      $region26: #{h_theta_adain_forward.1} parent=11 // pred_check_branch
        %239 = sbr.rel (%p237) target = $region28
      $region27: #{h_theta_adain_forward.1} parent=11 // pred_region
        _
      $region28: #{h_theta_adain_forward.1} parent=11 // pred_fallthru
        _
      // Predicated region
      $region29: #{h_theta_adain_forward.1} parent=11 // pred_check
        %p240 = pneg %p145
      $region30: #{h_theta_adain_forward.1} parent=11 // pred_check_branch
        %242 = sbr.rel (%p240) target = $region32
      $region31: #{h_theta_adain_forward.1} parent=11 // pred_region
        _
      $region32: #{h_theta_adain_forward.1} parent=11 // pred_fallthru
        _
      // Predicated region
      $region33: #{h_theta_adain_forward.1} parent=11 // pred_check
        %p243 = pneg %p166
      $region34: #{h_theta_adain_forward.1} parent=11 // pred_check_branch
        %245 = sbr.rel (%p243) target = $region36
      $region35: #{h_theta_adain_forward.1} parent=11 // pred_region
        _
      $region36: #{h_theta_adain_forward.1} parent=11 // pred_fallthru
        _
      // Predicated region
      $region37: #{h_theta_adain_forward.1} parent=11 // pred_check
        %p246 = pneg %p187
      $region38: #{h_theta_adain_forward.1} parent=11 // pred_check_branch
        %248 = sbr.rel (%p246) target = $region40
      $region39: #{h_theta_adain_forward.1} parent=11 // pred_region
        _
      $region40: #{h_theta_adain_forward.1} parent=11 // pred_fallthru
        _
    $region12: #{h_theta_adain_forward.1} parent=5 // pred_fallthru
      _
    %p249 = scmp.lt.s32.totalorder %s14, 4
    // Predicated region
    $region41: #{h_theta_adain_forward.1} parent=5 // pred_check
      %p250 = pneg %p249
    $region42: #{h_theta_adain_forward.1} parent=5 // pred_check_branch
      %252 = sbr.rel (%p250) target = $region44
    $region43: #{h_theta_adain_forward.1} parent=5 // pred_region
      // Predicated region
      $region45: #{h_theta_adain_forward.1} parent=43 // pred_check
        %p253 = pneg %p34
      $region46: #{h_theta_adain_forward.1} parent=43 // pred_check_branch
        %255 = sbr.rel (%p253) target = $region48
      $region47: #{h_theta_adain_forward.1} parent=43 // pred_region
        %s256 = smul.u32 8, %s14
        %p257 = scmp.lt.s32.totalorder %s256, 31
        %s258 = scalar_select %p257, %s256, 31
        %s259 = smul.addr %s258, 8
        %s260 = scalar_lea.vmem %s0, %s259
        %s261 = smul.u32 8, %s14
      $region48: #{h_theta_adain_forward.1} parent=43 // pred_fallthru
        _
    $region44: #{h_theta_adain_forward.1} parent=5 // pred_fallthru
      _
    %p262 = scmp.le.s32.totalorder 1, %s14
    %p263 = scmp.lt.s32.totalorder %s14, 5
    %p264 = pnand %p262, %p263
    %p265 = pneg %p264
    // Predicated region
    $region49: #{h_theta_adain_forward.1} parent=5 // pred_check
      _
    $region50: #{h_theta_adain_forward.1} parent=5 // pred_check_branch
      %267 = sbr.rel (%p264) target = $region52
    $region51: #{h_theta_adain_forward.1} parent=5 // pred_region
      %s268 = ssub.s32 %s14, 1
      %s269 = smul.u32 8, %s19
      %p270 = scmp.lt.s32.totalorder %s269, 31
      %s271 = scalar_select %p270, %s269, 31
      %s272 = smul.addr %s271, 8
      %s273 = scalar_lea.vmem %s0, %s272
      %p274 = pneg %p40
      %p275 = pneg %p37
      %p276 = pneg %p61
      %p277 = pneg %p58
      %p278 = pneg %p82
      %p279 = pneg %p79
      %p280 = pneg %p103
      %p281 = pneg %p100
      %p282 = pneg %p124
      %p283 = pneg %p121
      %p284 = pneg %p145
      %p285 = pneg %p142
      %p286 = pneg %p166
      %p287 = pneg %p163
      %p288 = pneg %p187
      %p289 = pneg %p184
      %p290 = pneg %p213
      %p291 = pneg %p210
      %s292 = smul.u32 8, %s19
      %p293 = scmp.lt.s32.totalorder %s292, 31
      %s294 = scalar_select %p293, %s292, 31
      %s295 = smul.addr %s294, 8
      %s296 = scalar_lea.vmem %s8, %s295
      %s297 = smul.u32 8, %s19
      %p298 = scmp.lt.s32.totalorder %s297, 31
      %s299 = scalar_select %p298, %s297, 31
      %s300 = smul.addr %s299, 8
      %s301 = scalar_lea.vmem %s0, %s300
      %s302 = smul.u32 8, %s19
      %s303 = smul.u32 8, %s19
      %p304 = scmp.lt.s32.totalorder %s303, 31
      %s305 = scalar_select %p304, %s303, 31
      %s306 = smul.addr %s305, 8
      %s307 = scalar_lea.vmem %s8, %s306
      %s308 = smul.u32 8, %s19
      %v309 = vld [vmem:[%s301] sm:$0xff]
      %v310 = vld [vmem:[%s301 + $0x8] sm:$0xff]
      %v311 = vld [vmem:[%s301 + $0x10] sm:$0xff]
      %v312 = vld [vmem:[%s301 + $0x18] sm:$0xff]
      %v313 = vld [vmem:[%s301 + $0x20] sm:$0xff]
      %v314 = vld [vmem:[%s301 + $0x28] sm:$0xff]
      %v315 = vld [vmem:[%s301 + $0x30] sm:$0xff]
      %v316 = vld [vmem:[%s301 + $0x38] sm:$0xff]
      %v317 = vld [vmem:[%s1] sm:$0xff]
      %v318 = vld [vmem:[%s1 + $0x8] sm:$0xff]
      %v319 = vld [vmem:[%s1 + $0x10] sm:$0xff]
      %v320 = vld [vmem:[%s1 + $0x18] sm:$0xff]
      %v321 = vld [vmem:[%s7] ss:$8 sm:$0x3]
      %v323 = vlaneseq
      %v324 = vshrl.u32 %v323, 7
      %v325 = vsub.s32 0, %v324
      %v326 = vrot.slane %v321, %v325
      %v327 = vlaneseq
      %v328 = vshrl.u32 %v327, 7
      %v329 = vsub.s32 1, %v328
      %v330 = vrot.slane %v321, %v329
      %vm333 = vcmask 130048
      %v335 = vsel %vm333, %v309, 0
      %v338 = vsel %vm333, %v310, 0
      %v341 = vsel %vm333, %v311, 0
      %v344 = vsel %vm333, %v312, 0
      %v347 = vsel %vm333, %v313, 0
      %v350 = vsel %vm333, %v314, 0
      %v353 = vsel %vm333, %v315, 0
      %v356 = vsel %vm333, %v316, 0
      %358 = vmatprep.subr.mxu0 %v318
      %359 = vmatpush1.msra.mxu0 %v317
      %360 = vmatprep.subr.mxu0 %v320
      %361 = vmatpush1.msra.mxu0 %v319
      %362 = vmatprep.subr.mxu0 0.0
      %363 = vmatpush1.msra.mxu0 0.0
      %364 = vmatprep.subr.mxu0 0.0
      %365 = vmatpush1.msra.mxu0 0.0
      %366 = vmatprep.subr.mxu0 0.0
      %367 = vmatpush1.msra.mxu0 0.0
      %368 = vmatprep.subr.mxu0 0.0
      %369 = vmatpush1.msra.mxu0 0.0
      %370 = vmatprep.subr.mxu0 0.0
      %371 = vmatpush1.msra.mxu0 0.0
      %372 = vmatprep.subr.mxu0 0.0
      %373 = vmatpush1.msra.mxu0 0.0
      %374 = vmatprep.subr.mxu0 0.0
      %375 = vmatpush1.msra.mxu0 0.0
      %376 = vmatprep.subr.mxu0 0.0
      %377 = vmatpush1.msra.mxu0 0.0
      %378 = vmatprep.subr.mxu0 0.0
      %379 = vmatpush1.msra.mxu0 0.0
      %380 = vmatprep.subr.mxu0 0.0
      %381 = vmatpush1.msra.mxu0 0.0
      %382 = vmatprep.subr.mxu0 0.0
      %383 = vmatpush1.msra.mxu0 0.0
      %384 = vmatprep.subr.mxu0 0.0
      %385 = vmatpush1.msra.mxu0 0.0
      %386 = vmatprep.subr.mxu0 0.0
      %387 = vmatpush1.msra.mxu0 0.0
      %388 = vmatprep.subr.mxu0 0.0
      %389 = vmatpush1.msra.mxu0 0.0
      %390 = vmatprep.subr.mxu0 0.0
      %391 = vmatpush1.msra.mxu0 0.0
      %392 = vmatprep.subr.mxu0 0.0
      %393 = vmatpush1.msra.mxu0 0.0
      %394 = vmatprep.subr.mxu0 0.0
      %395 = vmatpush1.msra.mxu0 0.0
      %396 = vmatprep.subr.mxu0 0.0
      %397 = vmatpush1.msra.mxu0 0.0
      %398 = vmatprep.subr.mxu0 0.0
      %399 = vmatpush1.msra.mxu0 0.0
      %400 = vmatprep.subr.mxu0 0.0
      %401 = vmatpush1.msra.mxu0 0.0
      %402 = vmatprep.subr.mxu0 0.0
      %403 = vmatpush1.msra.mxu0 0.0
      %404 = vmatprep.subr.mxu0 0.0
      %405 = vmatpush1.msra.mxu0 0.0
      %406 = vmatprep.subr.mxu0 0.0
      %407 = vmatpush1.msra.mxu0 0.0
      %408 = vmatprep.subr.mxu0 0.0
      %409 = vmatpush1.msra.mxu0 0.0
      %410 = vmatprep.subr.mxu0 0.0
      %411 = vmatpush1.msra.mxu0 0.0
      %412 = vmatprep.subr.mxu0 0.0
      %413 = vmatpush1.msra.mxu0 0.0
      %414 = vmatprep.subr.mxu0 0.0
      %415 = vmatpush1.msra.mxu0 0.0
      %416 = vmatprep.subr.mxu0 0.0
      %417 = vmatpush1.msra.mxu0 0.0
      %418 = vmatprep.subr.mxu0 0.0
      %419 = vmatpush1.msra.mxu0 0.0
      %420 = vmatprep.subr.mxu0 0.0
      %421 = vmatpush1.msra.mxu0 0.0
      %422 = vmatprep.mubr.f32.mxu0 0.0
      %423 = vmatmul.mubr.f32.gmra.mrb[0].mxu0 %v335
      %v424 = vpop.f32.mrb[0].mxu0
      %v425 = vadd.f32 %v326, %v424
      %v426 = vpop.f32.mrb[0].mxu0
      %v427 = vadd.f32 %v330, %v426
      %428 = vmatprep.mubr.f32.mxu0 0.0
      %429 = vmatmul.mubr.f32.gmra.mrb[0].mxu0 %v338
      %v430 = vpop.f32.mrb[0].mxu0
      %v431 = vadd.f32 %v326, %v430
      %v432 = vpop.f32.mrb[0].mxu0
      %v433 = vadd.f32 %v330, %v432
      %434 = vmatprep.mubr.f32.mxu0 0.0
      %435 = vmatmul.mubr.f32.gmra.mrb[0].mxu0 %v341
      %v436 = vpop.f32.mrb[0].mxu0
      %v437 = vadd.f32 %v326, %v436
      %v438 = vpop.f32.mrb[0].mxu0
      %v439 = vadd.f32 %v330, %v438
      %440 = vmatprep.mubr.f32.mxu0 0.0
      %441 = vmatmul.mubr.f32.gmra.mrb[0].mxu0 %v344
      %v442 = vpop.f32.mrb[0].mxu0
      %v443 = vadd.f32 %v326, %v442
      %v444 = vpop.f32.mrb[0].mxu0
      %v445 = vadd.f32 %v330, %v444
      %446 = vmatprep.mubr.f32.mxu0 0.0
      %447 = vmatmul.mubr.f32.gmra.mrb[0].mxu0 %v347
      %v448 = vpop.f32.mrb[0].mxu0
      %v449 = vadd.f32 %v326, %v448
      %v450 = vpop.f32.mrb[0].mxu0
      %v451 = vadd.f32 %v330, %v450
      %452 = vmatprep.mubr.f32.mxu0 0.0
      %453 = vmatmul.mubr.f32.gmra.mrb[0].mxu0 %v350
      %v454 = vpop.f32.mrb[0].mxu0
      %v455 = vadd.f32 %v326, %v454
      %v456 = vpop.f32.mrb[0].mxu0
      %v457 = vadd.f32 %v330, %v456
      %458 = vmatprep.mubr.f32.mxu0 0.0
      %459 = vmatmul.mubr.f32.gmra.mrb[0].mxu0 %v353
      %v460 = vpop.f32.mrb[0].mxu0
      %v461 = vadd.f32 %v326, %v460
      %v462 = vpop.f32.mrb[0].mxu0
      %v463 = vadd.f32 %v330, %v462
      %464 = vmatprep.mubr.f32.mxu0 0.0
      %465 = vmatmul.mubr.f32.gmra.mrb[0].mxu0 %v356
      %v466 = vpop.f32.mrb[0].mxu0
      %v467 = vadd.f32 %v326, %v466
      %v468 = vpop.f32.mrb[0].mxu0
      %v469 = vadd.f32 %v330, %v468
      %470 = vdwg.mxu0
      %v471 = vmax.f32 %v425, 0.0
      %v472 = vmax.f32 %v427, 0.0
      %v473 = vmax.f32 %v431, 0.0
      %v474 = vmax.f32 %v433, 0.0
      %v475 = vmax.f32 %v437, 0.0
      %v476 = vmax.f32 %v439, 0.0
      %v477 = vmax.f32 %v443, 0.0
      %v478 = vmax.f32 %v445, 0.0
      %v479 = vmax.f32 %v449, 0.0
      %v480 = vmax.f32 %v451, 0.0
      %v481 = vmax.f32 %v455, 0.0
      %v482 = vmax.f32 %v457, 0.0
      %v483 = vmax.f32 %v461, 0.0
      %v484 = vmax.f32 %v463, 0.0
      %v485 = vmax.f32 %v467, 0.0
      %v486 = vmax.f32 %v469, 0.0
      %v487 = vld [vmem:[%s2] sm:$0xff]
      %v488 = vld [vmem:[%s2 + $0x8] sm:$0xff]
      %v489 = vld [vmem:[%s2 + $0x10] sm:$0xff]
      %v490 = vld [vmem:[%s2 + $0x18] sm:$0xff]
      %v491 = vld [vmem:[%s2 + $0x20] sm:$0xff]
      %v492 = vld [vmem:[%s2 + $0x28] sm:$0xff]
      %v493 = vld [vmem:[%s2 + $0x30] sm:$0xff]
      %v494 = vld [vmem:[%s2 + $0x38] sm:$0xff]
      %v495 = vld [vmem:[%s2 + $0x40] sm:$0xff]
      %v496 = vld [vmem:[%s2 + $0x48] sm:$0xff]
      %v497 = vld [vmem:[%s2 + $0x50] sm:$0xff]
      %v498 = vld [vmem:[%s2 + $0x58] sm:$0xff]
      %v499 = vld [vmem:[%s2 + $0x60] sm:$0xff]
      %v500 = vld [vmem:[%s2 + $0x68] sm:$0xff]
      %v501 = vld [vmem:[%s2 + $0x70] sm:$0xff]
      %v502 = vld [vmem:[%s2 + $0x78] sm:$0xff]
      %v503 = vld [vmem:[%s2 + $0x80] sm:$0xff]
      %v504 = vld [vmem:[%s2 + $0x88] sm:$0xff]
      %v505 = vld [vmem:[%s2 + $0x90] sm:$0xff]
      %v506 = vld [vmem:[%s2 + $0x98] sm:$0xff]
      %v507 = vld [vmem:[%s2 + $0xa0] sm:$0xff]
      %v508 = vld [vmem:[%s2 + $0xa8] sm:$0xff]
      %v509 = vld [vmem:[%s2 + $0xb0] sm:$0xff]
      %v510 = vld [vmem:[%s2 + $0xb8] sm:$0xff]
      %v511 = vld [vmem:[%s2 + $0xc0] sm:$0xff]
      %v512 = vld [vmem:[%s2 + $0xc8] sm:$0xff]
      %v513 = vld [vmem:[%s2 + $0xd0] sm:$0xff]
      %v514 = vld [vmem:[%s2 + $0xd8] sm:$0xff]
      %v515 = vld [vmem:[%s2 + $0xe0] sm:$0xff]
      %v516 = vld [vmem:[%s2 + $0xe8] sm:$0xff]
      %v517 = vld [vmem:[%s2 + $0xf0] sm:$0xff]
      %v518 = vld [vmem:[%s2 + $0xf8] sm:$0xff]
      %v519 = vld [vmem:[%s2 + $0x100] sm:$0xff]
      %v520 = vld [vmem:[%s2 + $0x108] sm:$0xff]
      %v521 = vld [vmem:[%s2 + $0x110] sm:$0xff]
      %v522 = vld [vmem:[%s2 + $0x118] sm:$0xff]
      %v523 = vld [vmem:[%s2 + $0x120] sm:$0xff]
      %v524 = vld [vmem:[%s2 + $0x128] sm:$0xff]
      %v525 = vld [vmem:[%s2 + $0x130] sm:$0xff]
      %v526 = vld [vmem:[%s2 + $0x138] sm:$0xff]
      %v527 = vld [vmem:[%s2 + $0x140] sm:$0xff]
      %v528 = vld [vmem:[%s2 + $0x148] sm:$0xff]
      %v529 = vld [vmem:[%s2 + $0x150] sm:$0xff]
      %v530 = vld [vmem:[%s2 + $0x158] sm:$0xff]
      %v531 = vld [vmem:[%s2 + $0x160] sm:$0xff]
      %v532 = vld [vmem:[%s2 + $0x168] sm:$0xff]
      %v533 = vld [vmem:[%s2 + $0x170] sm:$0xff]
      %v534 = vld [vmem:[%s2 + $0x178] sm:$0xff]
      %v535 = vld [vmem:[%s2 + $0x180] sm:$0xff]
      %v536 = vld [vmem:[%s2 + $0x188] sm:$0xff]
      %v537 = vld [vmem:[%s2 + $0x190] sm:$0xff]
      %v538 = vld [vmem:[%s2 + $0x198] sm:$0xff]
      %v539 = vld [vmem:[%s2 + $0x1a0] sm:$0xff]
      %v540 = vld [vmem:[%s2 + $0x1a8] sm:$0xff]
      %v541 = vld [vmem:[%s2 + $0x1b0] sm:$0xff]
      %v542 = vld [vmem:[%s2 + $0x1b8] sm:$0xff]
      %v543 = vld [vmem:[%s2 + $0x1c0] sm:$0xff]
      %v544 = vld [vmem:[%s2 + $0x1c8] sm:$0xff]
      %v545 = vld [vmem:[%s2 + $0x1d0] sm:$0xff]
      %v546 = vld [vmem:[%s2 + $0x1d8] sm:$0xff]
      %v547 = vld [vmem:[%s2 + $0x1e0] sm:$0xff]
      %v548 = vld [vmem:[%s2 + $0x1e8] sm:$0xff]
      %v549 = vld [vmem:[%s2 + $0x1f0] sm:$0xff]
      %v550 = vld [vmem:[%s2 + $0x1f8] sm:$0xff]
      %s551 = scalar_lea.vmem %s7, 1
      %v552 = vld [vmem:[%s551] ss:$8 sm:$0x3]
      %v554 = vlaneseq
      %v555 = vshrl.u32 %v554, 7
      %v556 = vsub.s32 0, %v555
      %v557 = vrot.slane %v552, %v556
      %v558 = vlaneseq
      %v559 = vshrl.u32 %v558, 7
      %v560 = vsub.s32 1, %v559
      %v561 = vrot.slane %v552, %v560
      %564 = vmatprep.subr.mxu0 %v488
      %565 = vmatpush1.msra.mxu0 %v487
      %566 = vmatprep.subr.mxu0 %v490
      %567 = vmatpush1.msra.mxu0 %v489
      %568 = vmatprep.subr.mxu0 %v492
      %569 = vmatpush1.msra.mxu0 %v491
      %570 = vmatprep.subr.mxu0 %v494
      %571 = vmatpush1.msra.mxu0 %v493
      %572 = vmatprep.subr.mxu0 %v496
      %573 = vmatpush1.msra.mxu0 %v495
      %574 = vmatprep.subr.mxu0 %v498
      %575 = vmatpush1.msra.mxu0 %v497
      %576 = vmatprep.subr.mxu0 %v500
      %577 = vmatpush1.msra.mxu0 %v499
      %578 = vmatprep.subr.mxu0 %v502
      %579 = vmatpush1.msra.mxu0 %v501
      %580 = vmatprep.subr.mxu0 %v504
      %581 = vmatpush1.msra.mxu0 %v503
      %582 = vmatprep.subr.mxu0 %v506
      %583 = vmatpush1.msra.mxu0 %v505
      %584 = vmatprep.subr.mxu0 %v508
      %585 = vmatpush1.msra.mxu0 %v507
      %586 = vmatprep.subr.mxu0 %v510
      %587 = vmatpush1.msra.mxu0 %v509
      %588 = vmatprep.subr.mxu0 %v512
      %589 = vmatpush1.msra.mxu0 %v511
      %590 = vmatprep.subr.mxu0 %v514
      %591 = vmatpush1.msra.mxu0 %v513
      %592 = vmatprep.subr.mxu0 %v516
      %593 = vmatpush1.msra.mxu0 %v515
      %594 = vmatprep.subr.mxu0 %v518
      %595 = vmatpush1.msra.mxu0 %v517
      %596 = vmatprep.subr.mxu0 %v520
      %597 = vmatpush1.msra.mxu0 %v519
      %598 = vmatprep.subr.mxu0 %v522
      %599 = vmatpush1.msra.mxu0 %v521
      %600 = vmatprep.subr.mxu0 %v524
      %601 = vmatpush1.msra.mxu0 %v523
      %602 = vmatprep.subr.mxu0 %v526
      %603 = vmatpush1.msra.mxu0 %v525
      %604 = vmatprep.subr.mxu0 %v528
      %605 = vmatpush1.msra.mxu0 %v527
      %606 = vmatprep.subr.mxu0 %v530
      %607 = vmatpush1.msra.mxu0 %v529
      %608 = vmatprep.subr.mxu0 %v532
      %609 = vmatpush1.msra.mxu0 %v531
      %610 = vmatprep.subr.mxu0 %v534
      %611 = vmatpush1.msra.mxu0 %v533
      %612 = vmatprep.subr.mxu0 %v536
      %613 = vmatpush1.msra.mxu0 %v535
      %614 = vmatprep.subr.mxu0 %v538
      %615 = vmatpush1.msra.mxu0 %v537
      %616 = vmatprep.subr.mxu0 %v540
      %617 = vmatpush1.msra.mxu0 %v539
      %618 = vmatprep.subr.mxu0 %v542
      %619 = vmatpush1.msra.mxu0 %v541
      %620 = vmatprep.subr.mxu0 %v544
      %621 = vmatpush1.msra.mxu0 %v543
      %622 = vmatprep.subr.mxu0 %v546
      %623 = vmatpush1.msra.mxu0 %v545
      %624 = vmatprep.subr.mxu0 %v548
      %625 = vmatpush1.msra.mxu0 %v547
      %626 = vmatprep.subr.mxu0 %v550
      %627 = vmatpush1.msra.mxu0 %v549
      %628 = vmatprep.mubr.f32.mxu0 %v472
      %629 = vmatmul.mubr.f32.gmra.mrb[0].mxu0 %v471
      %v630 = vpop.f32.mrb[0].mxu0
      %v631 = vadd.f32 %v557, %v630
      %v632 = vpop.f32.mrb[0].mxu0
      %v633 = vadd.f32 %v561, %v632
      %634 = vmatprep.mubr.f32.mxu0 %v474
      %635 = vmatmul.mubr.f32.gmra.mrb[0].mxu0 %v473
      %v636 = vpop.f32.mrb[0].mxu0
      %v637 = vadd.f32 %v557, %v636
      %v638 = vpop.f32.mrb[0].mxu0
      %v639 = vadd.f32 %v561, %v638
      %640 = vmatprep.mubr.f32.mxu0 %v476
      %641 = vmatmul.mubr.f32.gmra.mrb[0].mxu0 %v475
      %v642 = vpop.f32.mrb[0].mxu0
      %v643 = vadd.f32 %v557, %v642
      %v644 = vpop.f32.mrb[0].mxu0
      %v645 = vadd.f32 %v561, %v644
      %646 = vmatprep.mubr.f32.mxu0 %v478
      %647 = vmatmul.mubr.f32.gmra.mrb[0].mxu0 %v477
      %v648 = vpop.f32.mrb[0].mxu0
      %v649 = vadd.f32 %v557, %v648
      %v650 = vpop.f32.mrb[0].mxu0
      %v651 = vadd.f32 %v561, %v650
      %652 = vmatprep.mubr.f32.mxu0 %v480
      %653 = vmatmul.mubr.f32.gmra.mrb[0].mxu0 %v479
      %v654 = vpop.f32.mrb[0].mxu0
      %v655 = vadd.f32 %v557, %v654
      %v656 = vpop.f32.mrb[0].mxu0
      %v657 = vadd.f32 %v561, %v656
      %658 = vmatprep.mubr.f32.mxu0 %v482
      %659 = vmatmul.mubr.f32.gmra.mrb[0].mxu0 %v481
      %v660 = vpop.f32.mrb[0].mxu0
      %v661 = vadd.f32 %v557, %v660
      %v662 = vpop.f32.mrb[0].mxu0
      %v663 = vadd.f32 %v561, %v662
      %664 = vmatprep.mubr.f32.mxu0 %v484
      %665 = vmatmul.mubr.f32.gmra.mrb[0].mxu0 %v483
      %v666 = vpop.f32.mrb[0].mxu0
      %v667 = vadd.f32 %v557, %v666
      %v668 = vpop.f32.mrb[0].mxu0
      %v669 = vadd.f32 %v561, %v668
      %670 = vmatprep.mubr.f32.mxu0 %v486
      %671 = vmatmul.mubr.f32.gmra.mrb[0].mxu0 %v485
      %v672 = vpop.f32.mrb[0].mxu0
      %v673 = vadd.f32 %v557, %v672
      %v674 = vpop.f32.mrb[0].mxu0
      %v675 = vadd.f32 %v561, %v674
      %676 = vdwg.mxu0
      %v677 = vmax.f32 %v631, 0.0
      %v678 = vmax.f32 %v633, 0.0
      %v679 = vmax.f32 %v637, 0.0
      %v680 = vmax.f32 %v639, 0.0
      %v681 = vmax.f32 %v643, 0.0
      %v682 = vmax.f32 %v645, 0.0
      %v683 = vmax.f32 %v649, 0.0
      %v684 = vmax.f32 %v651, 0.0
      %v685 = vmax.f32 %v655, 0.0
      %v686 = vmax.f32 %v657, 0.0
      %v687 = vmax.f32 %v661, 0.0
      %v688 = vmax.f32 %v663, 0.0
      %v689 = vmax.f32 %v667, 0.0
      %v690 = vmax.f32 %v669, 0.0
      %v691 = vmax.f32 %v673, 0.0
      %v692 = vmax.f32 %v675, 0.0
      %s693 = scalar_lea.vmem %s2, 512
      %v694 = vld [vmem:[%s693] sm:$0xff]
      %v695 = vld [vmem:[%s693 + $0x8] sm:$0xff]
      %v696 = vld [vmem:[%s693 + $0x10] sm:$0xff]
      %v697 = vld [vmem:[%s693 + $0x18] sm:$0xff]
      %v698 = vld [vmem:[%s693 + $0x20] sm:$0xff]
      %v699 = vld [vmem:[%s693 + $0x28] sm:$0xff]
      %v700 = vld [vmem:[%s693 + $0x30] sm:$0xff]
      %v701 = vld [vmem:[%s693 + $0x38] sm:$0xff]
      %v702 = vld [vmem:[%s693 + $0x40] sm:$0xff]
      %v703 = vld [vmem:[%s693 + $0x48] sm:$0xff]
      %v704 = vld [vmem:[%s693 + $0x50] sm:$0xff]
      %v705 = vld [vmem:[%s693 + $0x58] sm:$0xff]
      %v706 = vld [vmem:[%s693 + $0x60] sm:$0xff]
      %v707 = vld [vmem:[%s693 + $0x68] sm:$0xff]
      %v708 = vld [vmem:[%s693 + $0x70] sm:$0xff]
      %v709 = vld [vmem:[%s693 + $0x78] sm:$0xff]
      %v710 = vld [vmem:[%s693 + $0x80] sm:$0xff]
      %v711 = vld [vmem:[%s693 + $0x88] sm:$0xff]
      %v712 = vld [vmem:[%s693 + $0x90] sm:$0xff]
      %v713 = vld [vmem:[%s693 + $0x98] sm:$0xff]
      %v714 = vld [vmem:[%s693 + $0xa0] sm:$0xff]
      %v715 = vld [vmem:[%s693 + $0xa8] sm:$0xff]
      %v716 = vld [vmem:[%s693 + $0xb0] sm:$0xff]
      %v717 = vld [vmem:[%s693 + $0xb8] sm:$0xff]
      %v718 = vld [vmem:[%s693 + $0xc0] sm:$0xff]
      %v719 = vld [vmem:[%s693 + $0xc8] sm:$0xff]
      %v720 = vld [vmem:[%s693 + $0xd0] sm:$0xff]
      %v721 = vld [vmem:[%s693 + $0xd8] sm:$0xff]
      %v722 = vld [vmem:[%s693 + $0xe0] sm:$0xff]
      %v723 = vld [vmem:[%s693 + $0xe8] sm:$0xff]
      %v724 = vld [vmem:[%s693 + $0xf0] sm:$0xff]
      %v725 = vld [vmem:[%s693 + $0xf8] sm:$0xff]
      %v726 = vld [vmem:[%s693 + $0x100] sm:$0xff]
      %v727 = vld [vmem:[%s693 + $0x108] sm:$0xff]
      %v728 = vld [vmem:[%s693 + $0x110] sm:$0xff]
      %v729 = vld [vmem:[%s693 + $0x118] sm:$0xff]
      %v730 = vld [vmem:[%s693 + $0x120] sm:$0xff]
      %v731 = vld [vmem:[%s693 + $0x128] sm:$0xff]
      %v732 = vld [vmem:[%s693 + $0x130] sm:$0xff]
      %v733 = vld [vmem:[%s693 + $0x138] sm:$0xff]
      %v734 = vld [vmem:[%s693 + $0x140] sm:$0xff]
      %v735 = vld [vmem:[%s693 + $0x148] sm:$0xff]
      %v736 = vld [vmem:[%s693 + $0x150] sm:$0xff]
      %v737 = vld [vmem:[%s693 + $0x158] sm:$0xff]
      %v738 = vld [vmem:[%s693 + $0x160] sm:$0xff]
      %v739 = vld [vmem:[%s693 + $0x168] sm:$0xff]
      %v740 = vld [vmem:[%s693 + $0x170] sm:$0xff]
      %v741 = vld [vmem:[%s693 + $0x178] sm:$0xff]
      %v742 = vld [vmem:[%s693 + $0x180] sm:$0xff]
      %v743 = vld [vmem:[%s693 + $0x188] sm:$0xff]
      %v744 = vld [vmem:[%s693 + $0x190] sm:$0xff]
      %v745 = vld [vmem:[%s693 + $0x198] sm:$0xff]
      %v746 = vld [vmem:[%s693 + $0x1a0] sm:$0xff]
      %v747 = vld [vmem:[%s693 + $0x1a8] sm:$0xff]
      %v748 = vld [vmem:[%s693 + $0x1b0] sm:$0xff]
      %v749 = vld [vmem:[%s693 + $0x1b8] sm:$0xff]
      %v750 = vld [vmem:[%s693 + $0x1c0] sm:$0xff]
      %v751 = vld [vmem:[%s693 + $0x1c8] sm:$0xff]
      %v752 = vld [vmem:[%s693 + $0x1d0] sm:$0xff]
      %v753 = vld [vmem:[%s693 + $0x1d8] sm:$0xff]
      %v754 = vld [vmem:[%s693 + $0x1e0] sm:$0xff]
      %v755 = vld [vmem:[%s693 + $0x1e8] sm:$0xff]
      %v756 = vld [vmem:[%s693 + $0x1f0] sm:$0xff]
      %v757 = vld [vmem:[%s693 + $0x1f8] sm:$0xff]
      %s758 = scalar_lea.vmem %s7, 2
      %v759 = vld [vmem:[%s758] ss:$8 sm:$0x3]
      %v761 = vlaneseq
      %v762 = vshrl.u32 %v761, 7
      %v763 = vsub.s32 0, %v762
      %v764 = vrot.slane %v759, %v763
      %v765 = vlaneseq
      %v766 = vshrl.u32 %v765, 7
      %v767 = vsub.s32 1, %v766
      %v768 = vrot.slane %v759, %v767
      %771 = vmatprep.subr.mxu0 %v695
      %772 = vmatpush1.msra.mxu0 %v694
      %773 = vmatprep.subr.mxu0 %v697
      %774 = vmatpush1.msra.mxu0 %v696
      %775 = vmatprep.subr.mxu0 %v699
      %776 = vmatpush1.msra.mxu0 %v698
      %777 = vmatprep.subr.mxu0 %v701
      %778 = vmatpush1.msra.mxu0 %v700
      %779 = vmatprep.subr.mxu0 %v703
      %780 = vmatpush1.msra.mxu0 %v702
      %781 = vmatprep.subr.mxu0 %v705
      %782 = vmatpush1.msra.mxu0 %v704
      %783 = vmatprep.subr.mxu0 %v707
      %784 = vmatpush1.msra.mxu0 %v706
      %785 = vmatprep.subr.mxu0 %v709
      %786 = vmatpush1.msra.mxu0 %v708
      %787 = vmatprep.subr.mxu0 %v711
      %788 = vmatpush1.msra.mxu0 %v710
      %789 = vmatprep.subr.mxu0 %v713
      %790 = vmatpush1.msra.mxu0 %v712
      %791 = vmatprep.subr.mxu0 %v715
      %792 = vmatpush1.msra.mxu0 %v714
      %793 = vmatprep.subr.mxu0 %v717
      %794 = vmatpush1.msra.mxu0 %v716
      %795 = vmatprep.subr.mxu0 %v719
      %796 = vmatpush1.msra.mxu0 %v718
      %797 = vmatprep.subr.mxu0 %v721
      %798 = vmatpush1.msra.mxu0 %v720
      %799 = vmatprep.subr.mxu0 %v723
      %800 = vmatpush1.msra.mxu0 %v722
      %801 = vmatprep.subr.mxu0 %v725
      %802 = vmatpush1.msra.mxu0 %v724
      %803 = vmatprep.subr.mxu0 %v727
      %804 = vmatpush1.msra.mxu0 %v726
      %805 = vmatprep.subr.mxu0 %v729
      %806 = vmatpush1.msra.mxu0 %v728
      %807 = vmatprep.subr.mxu0 %v731
      %808 = vmatpush1.msra.mxu0 %v730
      %809 = vmatprep.subr.mxu0 %v733
      %810 = vmatpush1.msra.mxu0 %v732
      %811 = vmatprep.subr.mxu0 %v735
      %812 = vmatpush1.msra.mxu0 %v734
      %813 = vmatprep.subr.mxu0 %v737
      %814 = vmatpush1.msra.mxu0 %v736
      %815 = vmatprep.subr.mxu0 %v739
      %816 = vmatpush1.msra.mxu0 %v738
      %817 = vmatprep.subr.mxu0 %v741
      %818 = vmatpush1.msra.mxu0 %v740
      %819 = vmatprep.subr.mxu0 %v743
      %820 = vmatpush1.msra.mxu0 %v742
      %821 = vmatprep.subr.mxu0 %v745
      %822 = vmatpush1.msra.mxu0 %v744
      %823 = vmatprep.subr.mxu0 %v747
      %824 = vmatpush1.msra.mxu0 %v746
      %825 = vmatprep.subr.mxu0 %v749
      %826 = vmatpush1.msra.mxu0 %v748
      %827 = vmatprep.subr.mxu0 %v751
      %828 = vmatpush1.msra.mxu0 %v750
      %829 = vmatprep.subr.mxu0 %v753
      %830 = vmatpush1.msra.mxu0 %v752
      %831 = vmatprep.subr.mxu0 %v755
      %832 = vmatpush1.msra.mxu0 %v754
      %833 = vmatprep.subr.mxu0 %v757
      %834 = vmatpush1.msra.mxu0 %v756
      %835 = vmatprep.mubr.f32.mxu0 %v678
      %836 = vmatmul.mubr.f32.gmra.mrb[0].mxu0 %v677
      %v837 = vpop.f32.mrb[0].mxu0
      %v838 = vadd.f32 %v764, %v837
      %v839 = vpop.f32.mrb[0].mxu0
      %v840 = vadd.f32 %v768, %v839
      %841 = vmatprep.mubr.f32.mxu0 %v680
      %842 = vmatmul.mubr.f32.gmra.mrb[0].mxu0 %v679
      %v843 = vpop.f32.mrb[0].mxu0
      %v844 = vadd.f32 %v764, %v843
      %v845 = vpop.f32.mrb[0].mxu0
      %v846 = vadd.f32 %v768, %v845
      %847 = vmatprep.mubr.f32.mxu0 %v682
      %848 = vmatmul.mubr.f32.gmra.mrb[0].mxu0 %v681
      %v849 = vpop.f32.mrb[0].mxu0
      %v850 = vadd.f32 %v764, %v849
      %v851 = vpop.f32.mrb[0].mxu0
      %v852 = vadd.f32 %v768, %v851
      %853 = vmatprep.mubr.f32.mxu0 %v684
      %854 = vmatmul.mubr.f32.gmra.mrb[0].mxu0 %v683
      %v855 = vpop.f32.mrb[0].mxu0
      %v856 = vadd.f32 %v764, %v855
      %v857 = vpop.f32.mrb[0].mxu0
      %v858 = vadd.f32 %v768, %v857
      %859 = vmatprep.mubr.f32.mxu0 %v686
      %860 = vmatmul.mubr.f32.gmra.mrb[0].mxu0 %v685
      %v861 = vpop.f32.mrb[0].mxu0
      %v862 = vadd.f32 %v764, %v861
      %v863 = vpop.f32.mrb[0].mxu0
      %v864 = vadd.f32 %v768, %v863
      %865 = vmatprep.mubr.f32.mxu0 %v688
      %866 = vmatmul.mubr.f32.gmra.mrb[0].mxu0 %v687
      %v867 = vpop.f32.mrb[0].mxu0
      %v868 = vadd.f32 %v764, %v867
      %v869 = vpop.f32.mrb[0].mxu0
      %v870 = vadd.f32 %v768, %v869
      %871 = vmatprep.mubr.f32.mxu0 %v690
      %872 = vmatmul.mubr.f32.gmra.mrb[0].mxu0 %v689
      %v873 = vpop.f32.mrb[0].mxu0
      %v874 = vadd.f32 %v764, %v873
      %v875 = vpop.f32.mrb[0].mxu0
      %v876 = vadd.f32 %v768, %v875
      %877 = vmatprep.mubr.f32.mxu0 %v692
      %878 = vmatmul.mubr.f32.gmra.mrb[0].mxu0 %v691
      %v879 = vpop.f32.mrb[0].mxu0
      %v880 = vadd.f32 %v764, %v879
      %v881 = vpop.f32.mrb[0].mxu0
      %v882 = vadd.f32 %v768, %v881
      %883 = vdwg.mxu0
      %v884 = vmax.f32 %v838, 0.0
      %v885 = vmax.f32 %v840, 0.0
      %v886 = vmax.f32 %v844, 0.0
      %v887 = vmax.f32 %v846, 0.0
      %v888 = vmax.f32 %v850, 0.0
      %v889 = vmax.f32 %v852, 0.0
      %v890 = vmax.f32 %v856, 0.0
      %v891 = vmax.f32 %v858, 0.0
      %v892 = vmax.f32 %v862, 0.0
      %v893 = vmax.f32 %v864, 0.0
      %v894 = vmax.f32 %v868, 0.0
      %v895 = vmax.f32 %v870, 0.0
      %v896 = vmax.f32 %v874, 0.0
      %v897 = vmax.f32 %v876, 0.0
      %v898 = vmax.f32 %v880, 0.0
      %v899 = vmax.f32 %v882, 0.0
      %s900 = scalar_lea.vmem %s2, 1024
      %v901 = vld [vmem:[%s900] sm:$0xff]
      %v902 = vld [vmem:[%s900 + $0x8] sm:$0xff]
      %v903 = vld [vmem:[%s900 + $0x10] sm:$0xff]
      %v904 = vld [vmem:[%s900 + $0x18] sm:$0xff]
      %v905 = vld [vmem:[%s900 + $0x20] sm:$0xff]
      %v906 = vld [vmem:[%s900 + $0x28] sm:$0xff]
      %v907 = vld [vmem:[%s900 + $0x30] sm:$0xff]
      %v908 = vld [vmem:[%s900 + $0x38] sm:$0xff]
      %v909 = vld [vmem:[%s900 + $0x40] sm:$0xff]
      %v910 = vld [vmem:[%s900 + $0x48] sm:$0xff]
      %v911 = vld [vmem:[%s900 + $0x50] sm:$0xff]
      %v912 = vld [vmem:[%s900 + $0x58] sm:$0xff]
      %v913 = vld [vmem:[%s900 + $0x60] sm:$0xff]
      %v914 = vld [vmem:[%s900 + $0x68] sm:$0xff]
      %v915 = vld [vmem:[%s900 + $0x70] sm:$0xff]
      %v916 = vld [vmem:[%s900 + $0x78] sm:$0xff]
      %v917 = vld [vmem:[%s900 + $0x80] sm:$0xff]
      %v918 = vld [vmem:[%s900 + $0x88] sm:$0xff]
      %v919 = vld [vmem:[%s900 + $0x90] sm:$0xff]
      %v920 = vld [vmem:[%s900 + $0x98] sm:$0xff]
      %v921 = vld [vmem:[%s900 + $0xa0] sm:$0xff]
      %v922 = vld [vmem:[%s900 + $0xa8] sm:$0xff]
      %v923 = vld [vmem:[%s900 + $0xb0] sm:$0xff]
      %v924 = vld [vmem:[%s900 + $0xb8] sm:$0xff]
      %v925 = vld [vmem:[%s900 + $0xc0] sm:$0xff]
      %v926 = vld [vmem:[%s900 + $0xc8] sm:$0xff]
      %v927 = vld [vmem:[%s900 + $0xd0] sm:$0xff]
      %v928 = vld [vmem:[%s900 + $0xd8] sm:$0xff]
      %v929 = vld [vmem:[%s900 + $0xe0] sm:$0xff]
      %v930 = vld [vmem:[%s900 + $0xe8] sm:$0xff]
      %v931 = vld [vmem:[%s900 + $0xf0] sm:$0xff]
      %v932 = vld [vmem:[%s900 + $0xf8] sm:$0xff]
      %v933 = vld [vmem:[%s900 + $0x100] sm:$0xff]
      %v934 = vld [vmem:[%s900 + $0x108] sm:$0xff]
      %v935 = vld [vmem:[%s900 + $0x110] sm:$0xff]
      %v936 = vld [vmem:[%s900 + $0x118] sm:$0xff]
      %v937 = vld [vmem:[%s900 + $0x120] sm:$0xff]
      %v938 = vld [vmem:[%s900 + $0x128] sm:$0xff]
      %v939 = vld [vmem:[%s900 + $0x130] sm:$0xff]
      %v940 = vld [vmem:[%s900 + $0x138] sm:$0xff]
      %v941 = vld [vmem:[%s900 + $0x140] sm:$0xff]
      %v942 = vld [vmem:[%s900 + $0x148] sm:$0xff]
      %v943 = vld [vmem:[%s900 + $0x150] sm:$0xff]
      %v944 = vld [vmem:[%s900 + $0x158] sm:$0xff]
      %v945 = vld [vmem:[%s900 + $0x160] sm:$0xff]
      %v946 = vld [vmem:[%s900 + $0x168] sm:$0xff]
      %v947 = vld [vmem:[%s900 + $0x170] sm:$0xff]
      %v948 = vld [vmem:[%s900 + $0x178] sm:$0xff]
      %v949 = vld [vmem:[%s900 + $0x180] sm:$0xff]
      %v950 = vld [vmem:[%s900 + $0x188] sm:$0xff]
      %v951 = vld [vmem:[%s900 + $0x190] sm:$0xff]
      %v952 = vld [vmem:[%s900 + $0x198] sm:$0xff]
      %v953 = vld [vmem:[%s900 + $0x1a0] sm:$0xff]
      %v954 = vld [vmem:[%s900 + $0x1a8] sm:$0xff]
      %v955 = vld [vmem:[%s900 + $0x1b0] sm:$0xff]
      %v956 = vld [vmem:[%s900 + $0x1b8] sm:$0xff]
      %v957 = vld [vmem:[%s900 + $0x1c0] sm:$0xff]
      %v958 = vld [vmem:[%s900 + $0x1c8] sm:$0xff]
      %v959 = vld [vmem:[%s900 + $0x1d0] sm:$0xff]
      %v960 = vld [vmem:[%s900 + $0x1d8] sm:$0xff]
      %v961 = vld [vmem:[%s900 + $0x1e0] sm:$0xff]
      %v962 = vld [vmem:[%s900 + $0x1e8] sm:$0xff]
      %v963 = vld [vmem:[%s900 + $0x1f0] sm:$0xff]
      %v964 = vld [vmem:[%s900 + $0x1f8] sm:$0xff]
      %s965 = scalar_lea.vmem %s7, 3
      %v966 = vld [vmem:[%s965] ss:$8 sm:$0x3]
      %v968 = vlaneseq
      %v969 = vshrl.u32 %v968, 7
      %v970 = vsub.s32 0, %v969
      %v971 = vrot.slane %v966, %v970
      %v972 = vlaneseq
      %v973 = vshrl.u32 %v972, 7
      %v974 = vsub.s32 1, %v973
      %v975 = vrot.slane %v966, %v974
      %978 = vmatprep.subr.mxu0 %v902
      %979 = vmatpush1.msra.mxu0 %v901
      %980 = vmatprep.subr.mxu0 %v904
      %981 = vmatpush1.msra.mxu0 %v903
      %982 = vmatprep.subr.mxu0 %v906
      %983 = vmatpush1.msra.mxu0 %v905
      %984 = vmatprep.subr.mxu0 %v908
      %985 = vmatpush1.msra.mxu0 %v907
      %986 = vmatprep.subr.mxu0 %v910
      %987 = vmatpush1.msra.mxu0 %v909
      %988 = vmatprep.subr.mxu0 %v912
      %989 = vmatpush1.msra.mxu0 %v911
      %990 = vmatprep.subr.mxu0 %v914
      %991 = vmatpush1.msra.mxu0 %v913
      %992 = vmatprep.subr.mxu0 %v916
      %993 = vmatpush1.msra.mxu0 %v915
      %994 = vmatprep.subr.mxu0 %v918
      %995 = vmatpush1.msra.mxu0 %v917
      %996 = vmatprep.subr.mxu0 %v920
      %997 = vmatpush1.msra.mxu0 %v919
      %998 = vmatprep.subr.mxu0 %v922
      %999 = vmatpush1.msra.mxu0 %v921
      %1000 = vmatprep.subr.mxu0 %v924
      %1001 = vmatpush1.msra.mxu0 %v923
      %1002 = vmatprep.subr.mxu0 %v926
      %1003 = vmatpush1.msra.mxu0 %v925
      %1004 = vmatprep.subr.mxu0 %v928
      %1005 = vmatpush1.msra.mxu0 %v927
      %1006 = vmatprep.subr.mxu0 %v930
      %1007 = vmatpush1.msra.mxu0 %v929
      %1008 = vmatprep.subr.mxu0 %v932
      %1009 = vmatpush1.msra.mxu0 %v931
      %1010 = vmatprep.subr.mxu0 %v934
      %1011 = vmatpush1.msra.mxu0 %v933
      %1012 = vmatprep.subr.mxu0 %v936
      %1013 = vmatpush1.msra.mxu0 %v935
      %1014 = vmatprep.subr.mxu0 %v938
      %1015 = vmatpush1.msra.mxu0 %v937
      %1016 = vmatprep.subr.mxu0 %v940
      %1017 = vmatpush1.msra.mxu0 %v939
      %1018 = vmatprep.subr.mxu0 %v942
      %1019 = vmatpush1.msra.mxu0 %v941
      %1020 = vmatprep.subr.mxu0 %v944
      %1021 = vmatpush1.msra.mxu0 %v943
      %1022 = vmatprep.subr.mxu0 %v946
      %1023 = vmatpush1.msra.mxu0 %v945
      %1024 = vmatprep.subr.mxu0 %v948
      %1025 = vmatpush1.msra.mxu0 %v947
      %1026 = vmatprep.subr.mxu0 %v950
      %1027 = vmatpush1.msra.mxu0 %v949
      %1028 = vmatprep.subr.mxu0 %v952
      %1029 = vmatpush1.msra.mxu0 %v951
      %1030 = vmatprep.subr.mxu0 %v954
      %1031 = vmatpush1.msra.mxu0 %v953
      %1032 = vmatprep.subr.mxu0 %v956
      %1033 = vmatpush1.msra.mxu0 %v955
      %1034 = vmatprep.subr.mxu0 %v958
      %1035 = vmatpush1.msra.mxu0 %v957
      %1036 = vmatprep.subr.mxu0 %v960
      %1037 = vmatpush1.msra.mxu0 %v959
      %1038 = vmatprep.subr.mxu0 %v962
      %1039 = vmatpush1.msra.mxu0 %v961
      %1040 = vmatprep.subr.mxu0 %v964
      %1041 = vmatpush1.msra.mxu0 %v963
      %1042 = vmatprep.mubr.f32.mxu0 %v885
      %1043 = vmatmul.mubr.f32.gmra.mrb[0].mxu0 %v884
      %v1044 = vpop.f32.mrb[0].mxu0
      %v1045 = vadd.f32 %v971, %v1044
      %v1046 = vpop.f32.mrb[0].mxu0
      %v1047 = vadd.f32 %v975, %v1046
      %1048 = vmatprep.mubr.f32.mxu0 %v887
      %1049 = vmatmul.mubr.f32.gmra.mrb[0].mxu0 %v886
      %v1050 = vpop.f32.mrb[0].mxu0
      %v1051 = vadd.f32 %v971, %v1050
      %v1052 = vpop.f32.mrb[0].mxu0
      %v1053 = vadd.f32 %v975, %v1052
      %1054 = vmatprep.mubr.f32.mxu0 %v889
      %1055 = vmatmul.mubr.f32.gmra.mrb[0].mxu0 %v888
      %v1056 = vpop.f32.mrb[0].mxu0
      %v1057 = vadd.f32 %v971, %v1056
      %v1058 = vpop.f32.mrb[0].mxu0
      %v1059 = vadd.f32 %v975, %v1058
      %1060 = vmatprep.mubr.f32.mxu0 %v891
      %1061 = vmatmul.mubr.f32.gmra.mrb[0].mxu0 %v890
      %v1062 = vpop.f32.mrb[0].mxu0
      %v1063 = vadd.f32 %v971, %v1062
      %v1064 = vpop.f32.mrb[0].mxu0
      %v1065 = vadd.f32 %v975, %v1064
      %1066 = vmatprep.mubr.f32.mxu0 %v893
      %1067 = vmatmul.mubr.f32.gmra.mrb[0].mxu0 %v892
      %v1068 = vpop.f32.mrb[0].mxu0
      %v1069 = vadd.f32 %v971, %v1068
      %v1070 = vpop.f32.mrb[0].mxu0
      %v1071 = vadd.f32 %v975, %v1070
      %1072 = vmatprep.mubr.f32.mxu0 %v895
      %1073 = vmatmul.mubr.f32.gmra.mrb[0].mxu0 %v894
      %v1074 = vpop.f32.mrb[0].mxu0
      %v1075 = vadd.f32 %v971, %v1074
      %v1076 = vpop.f32.mrb[0].mxu0
      %v1077 = vadd.f32 %v975, %v1076
      %1078 = vmatprep.mubr.f32.mxu0 %v897
      %1079 = vmatmul.mubr.f32.gmra.mrb[0].mxu0 %v896
      %v1080 = vpop.f32.mrb[0].mxu0
      %v1081 = vadd.f32 %v971, %v1080
      %v1082 = vpop.f32.mrb[0].mxu0
      %v1083 = vadd.f32 %v975, %v1082
      %1084 = vmatprep.mubr.f32.mxu0 %v899
      %1085 = vmatmul.mubr.f32.gmra.mrb[0].mxu0 %v898
      %v1086 = vpop.f32.mrb[0].mxu0
      %v1087 = vadd.f32 %v971, %v1086
      %v1088 = vpop.f32.mrb[0].mxu0
      %v1089 = vadd.f32 %v975, %v1088
      %1090 = vdwg.mxu0
      %v1091 = vmax.f32 %v1045, 0.0
      %v1092 = vmax.f32 %v1047, 0.0
      %v1093 = vmax.f32 %v1051, 0.0
      %v1094 = vmax.f32 %v1053, 0.0
      %v1095 = vmax.f32 %v1057, 0.0
      %v1096 = vmax.f32 %v1059, 0.0
      %v1097 = vmax.f32 %v1063, 0.0
      %v1098 = vmax.f32 %v1065, 0.0
      %v1099 = vmax.f32 %v1069, 0.0
      %v1100 = vmax.f32 %v1071, 0.0
      %v1101 = vmax.f32 %v1075, 0.0
      %v1102 = vmax.f32 %v1077, 0.0
      %v1103 = vmax.f32 %v1081, 0.0
      %v1104 = vmax.f32 %v1083, 0.0
      %v1105 = vmax.f32 %v1087, 0.0
      %v1106 = vmax.f32 %v1089, 0.0
      %v1107 = vld [vmem:[%s3] sm:$0xff]
      %v1108 = vld [vmem:[%s3 + $0x8] sm:$0xff]
      %v1109 = vld [vmem:[%s3 + $0x10] sm:$0xff]
      %v1110 = vld [vmem:[%s3 + $0x18] sm:$0xff]
      %v1111 = vld [vmem:[%s3 + $0x20] sm:$0xff]
      %v1112 = vld [vmem:[%s3 + $0x28] sm:$0xff]
      %v1113 = vld [vmem:[%s3 + $0x30] sm:$0xff]
      %v1114 = vld [vmem:[%s3 + $0x38] sm:$0xff]
      %v1115 = vld [vmem:[%s3 + $0x40] sm:$0xff]
      %v1116 = vld [vmem:[%s3 + $0x48] sm:$0xff]
      %v1117 = vld [vmem:[%s3 + $0x50] sm:$0xff]
      %v1118 = vld [vmem:[%s3 + $0x58] sm:$0xff]
      %v1119 = vld [vmem:[%s3 + $0x60] sm:$0xff]
      %v1120 = vld [vmem:[%s3 + $0x68] sm:$0xff]
      %v1121 = vld [vmem:[%s3 + $0x70] sm:$0xff]
      %v1122 = vld [vmem:[%s3 + $0x78] sm:$0xff]
      %v1123 = vld [vmem:[%s3 + $0x80] sm:$0xff]
      %v1124 = vld [vmem:[%s3 + $0x88] sm:$0xff]
      %v1125 = vld [vmem:[%s3 + $0x90] sm:$0xff]
      %v1126 = vld [vmem:[%s3 + $0x98] sm:$0xff]
      %v1127 = vld [vmem:[%s3 + $0xa0] sm:$0xff]
      %v1128 = vld [vmem:[%s3 + $0xa8] sm:$0xff]
      %v1129 = vld [vmem:[%s3 + $0xb0] sm:$0xff]
      %v1130 = vld [vmem:[%s3 + $0xb8] sm:$0xff]
      %v1131 = vld [vmem:[%s3 + $0xc0] sm:$0xff]
      %v1132 = vld [vmem:[%s3 + $0xc8] sm:$0xff]
      %v1133 = vld [vmem:[%s3 + $0xd0] sm:$0xff]
      %v1134 = vld [vmem:[%s3 + $0xd8] sm:$0xff]
      %v1135 = vld [vmem:[%s3 + $0xe0] sm:$0xff]
      %v1136 = vld [vmem:[%s3 + $0xe8] sm:$0xff]
      %v1137 = vld [vmem:[%s3 + $0xf0] sm:$0xff]
      %v1138 = vld [vmem:[%s3 + $0xf8] sm:$0xff]
      %s1139 = scalar_lea.vmem %s7, 4
      %v1140 = vld [vmem:[%s1139] ss:$8 sm:$0x3]
      %v1142 = vlaneseq
      %v1143 = vshrl.u32 %v1142, 7
      %v1144 = vsub.s32 0, %v1143
      %v1145 = vrot.slane %v1140, %v1144
      %1147 = vmatprep.subr.mxu0 0.0
      %1148 = vmatpush1.msra.mxu0 %v1107
      %1149 = vmatprep.subr.mxu0 0.0
      %1150 = vmatpush1.msra.mxu0 %v1108
      %1151 = vmatprep.subr.mxu0 0.0
      %1152 = vmatpush1.msra.mxu0 %v1109
      %1153 = vmatprep.subr.mxu0 0.0
      %1154 = vmatpush1.msra.mxu0 %v1110
      %1155 = vmatprep.subr.mxu0 0.0
      %1156 = vmatpush1.msra.mxu0 %v1111
      %1157 = vmatprep.subr.mxu0 0.0
      %1158 = vmatpush1.msra.mxu0 %v1112
      %1159 = vmatprep.subr.mxu0 0.0
      %1160 = vmatpush1.msra.mxu0 %v1113
      %1161 = vmatprep.subr.mxu0 0.0
      %1162 = vmatpush1.msra.mxu0 %v1114
      %1163 = vmatprep.subr.mxu0 0.0
      %1164 = vmatpush1.msra.mxu0 %v1115
      %1165 = vmatprep.subr.mxu0 0.0
      %1166 = vmatpush1.msra.mxu0 %v1116
      %1167 = vmatprep.subr.mxu0 0.0
      %1168 = vmatpush1.msra.mxu0 %v1117
      %1169 = vmatprep.subr.mxu0 0.0
      %1170 = vmatpush1.msra.mxu0 %v1118
      %1171 = vmatprep.subr.mxu0 0.0
      %1172 = vmatpush1.msra.mxu0 %v1119
      %1173 = vmatprep.subr.mxu0 0.0
      %1174 = vmatpush1.msra.mxu0 %v1120
      %1175 = vmatprep.subr.mxu0 0.0
      %1176 = vmatpush1.msra.mxu0 %v1121
      %1177 = vmatprep.subr.mxu0 0.0
      %1178 = vmatpush1.msra.mxu0 %v1122
      %1179 = vmatprep.subr.mxu0 0.0
      %1180 = vmatpush1.msra.mxu0 %v1123
      %1181 = vmatprep.subr.mxu0 0.0
      %1182 = vmatpush1.msra.mxu0 %v1124
      %1183 = vmatprep.subr.mxu0 0.0
      %1184 = vmatpush1.msra.mxu0 %v1125
      %1185 = vmatprep.subr.mxu0 0.0
      %1186 = vmatpush1.msra.mxu0 %v1126
      %1187 = vmatprep.subr.mxu0 0.0
      %1188 = vmatpush1.msra.mxu0 %v1127
      %1189 = vmatprep.subr.mxu0 0.0
      %1190 = vmatpush1.msra.mxu0 %v1128
      %1191 = vmatprep.subr.mxu0 0.0
      %1192 = vmatpush1.msra.mxu0 %v1129
      %1193 = vmatprep.subr.mxu0 0.0
      %1194 = vmatpush1.msra.mxu0 %v1130
      %1195 = vmatprep.subr.mxu0 0.0
      %1196 = vmatpush1.msra.mxu0 %v1131
      %1197 = vmatprep.subr.mxu0 0.0
      %1198 = vmatpush1.msra.mxu0 %v1132
      %1199 = vmatprep.subr.mxu0 0.0
      %1200 = vmatpush1.msra.mxu0 %v1133
      %1201 = vmatprep.subr.mxu0 0.0
      %1202 = vmatpush1.msra.mxu0 %v1134
      %1203 = vmatprep.subr.mxu0 0.0
      %1204 = vmatpush1.msra.mxu0 %v1135
      %1205 = vmatprep.subr.mxu0 0.0
      %1206 = vmatpush1.msra.mxu0 %v1136
      %1207 = vmatprep.subr.mxu0 0.0
      %1208 = vmatpush1.msra.mxu0 %v1137
      %1209 = vmatprep.subr.mxu0 0.0
      %1210 = vmatpush1.msra.mxu0 %v1138
      %1211 = vmatprep.mubr.f32.mxu0 %v1092
      %1212 = vmatmul.mubr.f32.gmra.mrb[0].mxu0 %v1091
      %v1213 = vpop.f32.mrb[0].mxu0
      %v1214 = vadd.f32 %v1145, %v1213
      %v1215 = vpop.f32.mrb[0].mxu0
      %1216 = vmatprep.mubr.f32.mxu0 %v1094
      %1217 = vmatmul.mubr.f32.gmra.mrb[0].mxu0 %v1093
      %v1218 = vpop.f32.mrb[0].mxu0
      %v1219 = vadd.f32 %v1145, %v1218
      %v1220 = vpop.f32.mrb[0].mxu0
      %1221 = vmatprep.mubr.f32.mxu0 %v1096
      %1222 = vmatmul.mubr.f32.gmra.mrb[0].mxu0 %v1095
      %v1223 = vpop.f32.mrb[0].mxu0
      %v1224 = vadd.f32 %v1145, %v1223
      %v1225 = vpop.f32.mrb[0].mxu0
      %1226 = vmatprep.mubr.f32.mxu0 %v1098
      %1227 = vmatmul.mubr.f32.gmra.mrb[0].mxu0 %v1097
      %v1228 = vpop.f32.mrb[0].mxu0
      %v1229 = vadd.f32 %v1145, %v1228
      %v1230 = vpop.f32.mrb[0].mxu0
      %1231 = vmatprep.mubr.f32.mxu0 %v1100
      %1232 = vmatmul.mubr.f32.gmra.mrb[0].mxu0 %v1099
      %v1233 = vpop.f32.mrb[0].mxu0
      %v1234 = vadd.f32 %v1145, %v1233
      %v1235 = vpop.f32.mrb[0].mxu0
      %1236 = vmatprep.mubr.f32.mxu0 %v1102
      %1237 = vmatmul.mubr.f32.gmra.mrb[0].mxu0 %v1101
      %v1238 = vpop.f32.mrb[0].mxu0
      %v1239 = vadd.f32 %v1145, %v1238
      %v1240 = vpop.f32.mrb[0].mxu0
      %1241 = vmatprep.mubr.f32.mxu0 %v1104
      %1242 = vmatmul.mubr.f32.gmra.mrb[0].mxu0 %v1103
      %v1243 = vpop.f32.mrb[0].mxu0
      %v1244 = vadd.f32 %v1145, %v1243
      %v1245 = vpop.f32.mrb[0].mxu0
      %1246 = vmatprep.mubr.f32.mxu0 %v1106
      %1247 = vmatmul.mubr.f32.gmra.mrb[0].mxu0 %v1105
      %v1248 = vpop.f32.mrb[0].mxu0
      %v1249 = vadd.f32 %v1145, %v1248
      %v1250 = vpop.f32.mrb[0].mxu0
      %1251 = vdwg.mxu0
      %v1252 = vlaneseq
      %v1253 = vand.u32 %v1252, 127
      %vm1254 = vcmp.lt.s32.totalorder %v1253, 0
      %v1255 = vsub.s32 0, %v1253
      %v1256 = vsel %vm1254, %v1255, %v1253
      %v1257 = vshrl.u32 %v1256, 1
      %v1258 = vand.u32 %v1256, 1
      %v1259 = vsub.s32 0, %v1258
      %v1260 = vsel %vm1254, %v1259, %v1258
      %vm1261 = vcmp.ne.s32.totalorder %v1260, 0
      %vm1262 = vcmp.lt.s32.totalorder %v1260, 0
      %vm1263 = vmand %vm1262, %vm1261
      %v1264 = vadd.s32 %v1260, 2
      %v1265 = vsel %vm1263, %v1264, %v1260
      %vm1266 = vcmp.eq.s32.totalorder %v1265, 0
      %v1267 = vadd.f32 %v1214, 1.0
      %v1268 = vadd.f32 %v1219, 1.0
      %v1269 = vadd.f32 %v1224, 1.0
      %v1270 = vadd.f32 %v1229, 1.0
      %v1271 = vadd.f32 %v1234, 1.0
      %v1272 = vadd.f32 %v1239, 1.0
      %v1273 = vadd.f32 %v1244, 1.0
      %v1274 = vadd.f32 %v1249, 1.0
      %v1275 = vmax.f32 %v1267, 0.0
      %v1276 = vmax.f32 %v1268, 0.0
      %v1277 = vmax.f32 %v1269, 0.0
      %v1278 = vmax.f32 %v1270, 0.0
      %v1279 = vmax.f32 %v1271, 0.0
      %v1280 = vmax.f32 %v1272, 0.0
      %v1281 = vmax.f32 %v1273, 0.0
      %v1282 = vmax.f32 %v1274, 0.0
      %v1283 = vsel %vm1266, %v1275, %v1214
      %v1284 = vsel %vm1266, %v1276, %v1219
      %v1285 = vsel %vm1266, %v1277, %v1224
      %v1286 = vsel %vm1266, %v1278, %v1229
      %v1287 = vsel %vm1266, %v1279, %v1234
      %v1288 = vsel %vm1266, %v1280, %v1239
      %v1289 = vsel %vm1266, %v1281, %v1244
      %v1290 = vsel %vm1266, %v1282, %v1249
      %v1291 = vld [vmem:[%s4] sm:$0xff]
      %s1292 = scalar_lea.vmem %s7, 5
      %v1293 = vld [vmem:[%s1292] ss:$8 sm:$0x3]
      %v1295 = vlaneseq
      %v1296 = vshrl.u32 %v1295, 7
      %v1297 = vsub.s32 0, %v1296
      %v1298 = vrot.slane %v1293, %v1297
      %vm1300 = vcmask 64512
      %v1302 = vsel %vm1300, %v1283, 0
      %v1305 = vsel %vm1300, %v1284, 0
      %v1308 = vsel %vm1300, %v1285, 0
      %v1311 = vsel %vm1300, %v1286, 0
      %v1314 = vsel %vm1300, %v1287, 0
      %v1317 = vsel %vm1300, %v1288, 0
      %v1320 = vsel %vm1300, %v1289, 0
      %v1323 = vsel %vm1300, %v1290, 0
      %1325 = vmatprep.subr.mxu0 0.0
      %1326 = vmatpush1.msra.mxu0 %v1291
      %1327 = vmatprep.subr.mxu0 0.0
      %1328 = vmatpush1.msra.mxu0 0.0
      %1329 = vmatprep.subr.mxu0 0.0
      %1330 = vmatpush1.msra.mxu0 0.0
      %1331 = vmatprep.subr.mxu0 0.0
      %1332 = vmatpush1.msra.mxu0 0.0
      %1333 = vmatprep.subr.mxu0 0.0
      %1334 = vmatpush1.msra.mxu0 0.0
      %1335 = vmatprep.subr.mxu0 0.0
      %1336 = vmatpush1.msra.mxu0 0.0
      %1337 = vmatprep.subr.mxu0 0.0
      %1338 = vmatpush1.msra.mxu0 0.0
      %1339 = vmatprep.subr.mxu0 0.0
      %1340 = vmatpush1.msra.mxu0 0.0
      %1341 = vmatprep.subr.mxu0 0.0
      %1342 = vmatpush1.msra.mxu0 0.0
      %1343 = vmatprep.subr.mxu0 0.0
      %1344 = vmatpush1.msra.mxu0 0.0
      %1345 = vmatprep.subr.mxu0 0.0
      %1346 = vmatpush1.msra.mxu0 0.0
      %1347 = vmatprep.subr.mxu0 0.0
      %1348 = vmatpush1.msra.mxu0 0.0
      %1349 = vmatprep.subr.mxu0 0.0
      %1350 = vmatpush1.msra.mxu0 0.0
      %1351 = vmatprep.subr.mxu0 0.0
      %1352 = vmatpush1.msra.mxu0 0.0
      %1353 = vmatprep.subr.mxu0 0.0
      %1354 = vmatpush1.msra.mxu0 0.0
      %1355 = vmatprep.subr.mxu0 0.0
      %1356 = vmatpush1.msra.mxu0 0.0
      %1357 = vmatprep.subr.mxu0 0.0
      %1358 = vmatpush1.msra.mxu0 0.0
      %1359 = vmatprep.subr.mxu0 0.0
      %1360 = vmatpush1.msra.mxu0 0.0
      %1361 = vmatprep.subr.mxu0 0.0
      %1362 = vmatpush1.msra.mxu0 0.0
      %1363 = vmatprep.subr.mxu0 0.0
      %1364 = vmatpush1.msra.mxu0 0.0
      %1365 = vmatprep.subr.mxu0 0.0
      %1366 = vmatpush1.msra.mxu0 0.0
      %1367 = vmatprep.subr.mxu0 0.0
      %1368 = vmatpush1.msra.mxu0 0.0
      %1369 = vmatprep.subr.mxu0 0.0
      %1370 = vmatpush1.msra.mxu0 0.0
      %1371 = vmatprep.subr.mxu0 0.0
      %1372 = vmatpush1.msra.mxu0 0.0
      %1373 = vmatprep.subr.mxu0 0.0
      %1374 = vmatpush1.msra.mxu0 0.0
      %1375 = vmatprep.subr.mxu0 0.0
      %1376 = vmatpush1.msra.mxu0 0.0
      %1377 = vmatprep.subr.mxu0 0.0
      %1378 = vmatpush1.msra.mxu0 0.0
      %1379 = vmatprep.subr.mxu0 0.0
      %1380 = vmatpush1.msra.mxu0 0.0
      %1381 = vmatprep.subr.mxu0 0.0
      %1382 = vmatpush1.msra.mxu0 0.0
      %1383 = vmatprep.subr.mxu0 0.0
      %1384 = vmatpush1.msra.mxu0 0.0
      %1385 = vmatprep.subr.mxu0 0.0
      %1386 = vmatpush1.msra.mxu0 0.0
      %1387 = vmatprep.subr.mxu0 0.0
      %1388 = vmatpush1.msra.mxu0 0.0
      %1389 = vmatprep.mubr.f32.mxu0 0.0
      %1390 = vmatmul.mubr.f32.gmra.mrb[0].mxu0 %v1302
      %v1391 = vpop.f32.mrb[0].mxu0
      %v1392 = vadd.f32 %v1298, %v1391
      %v1393 = vpop.f32.mrb[0].mxu0
      %1394 = vmatprep.mubr.f32.mxu0 0.0
      %1395 = vmatmul.mubr.f32.gmra.mrb[0].mxu0 %v1305
      %v1396 = vpop.f32.mrb[0].mxu0
      %v1397 = vadd.f32 %v1298, %v1396
      %v1398 = vpop.f32.mrb[0].mxu0
      %1399 = vmatprep.mubr.f32.mxu0 0.0
      %1400 = vmatmul.mubr.f32.gmra.mrb[0].mxu0 %v1308
      %v1401 = vpop.f32.mrb[0].mxu0
      %v1402 = vadd.f32 %v1298, %v1401
      %v1403 = vpop.f32.mrb[0].mxu0
      %1404 = vmatprep.mubr.f32.mxu0 0.0
      %1405 = vmatmul.mubr.f32.gmra.mrb[0].mxu0 %v1311
      %v1406 = vpop.f32.mrb[0].mxu0
      %v1407 = vadd.f32 %v1298, %v1406
      %v1408 = vpop.f32.mrb[0].mxu0
      %1409 = vmatprep.mubr.f32.mxu0 0.0
      %1410 = vmatmul.mubr.f32.gmra.mrb[0].mxu0 %v1314
      %v1411 = vpop.f32.mrb[0].mxu0
      %v1412 = vadd.f32 %v1298, %v1411
      %v1413 = vpop.f32.mrb[0].mxu0
      %1414 = vmatprep.mubr.f32.mxu0 0.0
      %1415 = vmatmul.mubr.f32.gmra.mrb[0].mxu0 %v1317
      %v1416 = vpop.f32.mrb[0].mxu0
      %v1417 = vadd.f32 %v1298, %v1416
      %v1418 = vpop.f32.mrb[0].mxu0
      %1419 = vmatprep.mubr.f32.mxu0 0.0
      %1420 = vmatmul.mubr.f32.gmra.mrb[0].mxu0 %v1320
      %v1421 = vpop.f32.mrb[0].mxu0
      %v1422 = vadd.f32 %v1298, %v1421
      %v1423 = vpop.f32.mrb[0].mxu0
      %1424 = vmatprep.mubr.f32.mxu0 0.0
      %1425 = vmatmul.mubr.f32.gmra.mrb[0].mxu0 %v1323
      %v1426 = vpop.f32.mrb[0].mxu0
      %v1427 = vadd.f32 %v1298, %v1426
      %v1428 = vpop.f32.mrb[0].mxu0
      %1429 = vdwg.mxu0
      %v1430 = vmax.f32 %v1392, 0.0
      %v1431 = vmax.f32 %v1397, 0.0
      %v1432 = vmax.f32 %v1402, 0.0
      %v1433 = vmax.f32 %v1407, 0.0
      %v1434 = vmax.f32 %v1412, 0.0
      %v1435 = vmax.f32 %v1417, 0.0
      %v1436 = vmax.f32 %v1422, 0.0
      %v1437 = vmax.f32 %v1427, 0.0
      %v1438 = vld [vmem:[%s5] sm:$0xff]
      %v1439 = vld [vmem:[%s5 + $0x8] sm:$0xff]
      %v1440 = vld [vmem:[%s5 + $0x10] sm:$0xff]
      %v1441 = vld [vmem:[%s5 + $0x18] sm:$0xff]
      %v1442 = vld [vmem:[%s5 + $0x20] sm:$0xff]
      %v1443 = vld [vmem:[%s5 + $0x28] sm:$0xff]
      %v1444 = vld [vmem:[%s5 + $0x30] sm:$0xff]
      %v1445 = vld [vmem:[%s5 + $0x38] sm:$0xff]
      %v1446 = vld [vmem:[%s5 + $0x40] sm:$0xff]
      %v1447 = vld [vmem:[%s5 + $0x48] sm:$0xff]
      %v1448 = vld [vmem:[%s5 + $0x50] sm:$0xff]
      %v1449 = vld [vmem:[%s5 + $0x58] sm:$0xff]
      %v1450 = vld [vmem:[%s5 + $0x60] sm:$0xff]
      %v1451 = vld [vmem:[%s5 + $0x68] sm:$0xff]
      %v1452 = vld [vmem:[%s5 + $0x70] sm:$0xff]
      %v1453 = vld [vmem:[%s5 + $0x78] sm:$0xff]
      %s1454 = scalar_lea.vmem %s7, 6
      %v1455 = vld [vmem:[%s1454] ss:$8 sm:$0x3]
      %v1457 = vlaneseq
      %v1458 = vshrl.u32 %v1457, 7
      %v1459 = vsub.s32 0, %v1458
      %v1460 = vrot.slane %v1455, %v1459
      %1462 = vmatprep.subr.mxu0 0.0
      %1463 = vmatpush1.msra.mxu0 %v1438
      %1464 = vmatprep.subr.mxu0 0.0
      %1465 = vmatpush1.msra.mxu0 %v1439
      %1466 = vmatprep.subr.mxu0 0.0
      %1467 = vmatpush1.msra.mxu0 %v1440
      %1468 = vmatprep.subr.mxu0 0.0
      %1469 = vmatpush1.msra.mxu0 %v1441
      %1470 = vmatprep.subr.mxu0 0.0
      %1471 = vmatpush1.msra.mxu0 %v1442
      %1472 = vmatprep.subr.mxu0 0.0
      %1473 = vmatpush1.msra.mxu0 %v1443
      %1474 = vmatprep.subr.mxu0 0.0
      %1475 = vmatpush1.msra.mxu0 %v1444
      %1476 = vmatprep.subr.mxu0 0.0
      %1477 = vmatpush1.msra.mxu0 %v1445
      %1478 = vmatprep.subr.mxu0 0.0
      %1479 = vmatpush1.msra.mxu0 %v1446
      %1480 = vmatprep.subr.mxu0 0.0
      %1481 = vmatpush1.msra.mxu0 %v1447
      %1482 = vmatprep.subr.mxu0 0.0
      %1483 = vmatpush1.msra.mxu0 %v1448
      %1484 = vmatprep.subr.mxu0 0.0
      %1485 = vmatpush1.msra.mxu0 %v1449
      %1486 = vmatprep.subr.mxu0 0.0
      %1487 = vmatpush1.msra.mxu0 %v1450
      %1488 = vmatprep.subr.mxu0 0.0
      %1489 = vmatpush1.msra.mxu0 %v1451
      %1490 = vmatprep.subr.mxu0 0.0
      %1491 = vmatpush1.msra.mxu0 %v1452
      %1492 = vmatprep.subr.mxu0 0.0
      %1493 = vmatpush1.msra.mxu0 %v1453
      %1494 = vmatprep.subr.mxu0 0.0
      %1495 = vmatpush1.msra.mxu0 0.0
      %1496 = vmatprep.subr.mxu0 0.0
      %1497 = vmatpush1.msra.mxu0 0.0
      %1498 = vmatprep.subr.mxu0 0.0
      %1499 = vmatpush1.msra.mxu0 0.0
      %1500 = vmatprep.subr.mxu0 0.0
      %1501 = vmatpush1.msra.mxu0 0.0
      %1502 = vmatprep.subr.mxu0 0.0
      %1503 = vmatpush1.msra.mxu0 0.0
      %1504 = vmatprep.subr.mxu0 0.0
      %1505 = vmatpush1.msra.mxu0 0.0
      %1506 = vmatprep.subr.mxu0 0.0
      %1507 = vmatpush1.msra.mxu0 0.0
      %1508 = vmatprep.subr.mxu0 0.0
      %1509 = vmatpush1.msra.mxu0 0.0
      %1510 = vmatprep.subr.mxu0 0.0
      %1511 = vmatpush1.msra.mxu0 0.0
      %1512 = vmatprep.subr.mxu0 0.0
      %1513 = vmatpush1.msra.mxu0 0.0
      %1514 = vmatprep.subr.mxu0 0.0
      %1515 = vmatpush1.msra.mxu0 0.0
      %1516 = vmatprep.subr.mxu0 0.0
      %1517 = vmatpush1.msra.mxu0 0.0
      %1518 = vmatprep.subr.mxu0 0.0
      %1519 = vmatpush1.msra.mxu0 0.0
      %1520 = vmatprep.subr.mxu0 0.0
      %1521 = vmatpush1.msra.mxu0 0.0
      %1522 = vmatprep.subr.mxu0 0.0
      %1523 = vmatpush1.msra.mxu0 0.0
      %1524 = vmatprep.subr.mxu0 0.0
      %1525 = vmatpush1.msra.mxu0 0.0
      %1526 = vmatprep.mubr.f32.mxu0 0.0
      %1527 = vmatmul.mubr.f32.gmra.mrb[0].mxu0 %v1430
      %v1528 = vpop.f32.mrb[0].mxu0
      %v1529 = vadd.f32 %v1460, %v1528
      %v1530 = vpop.f32.mrb[0].mxu0
      %1531 = vmatprep.mubr.f32.mxu0 0.0
      %1532 = vmatmul.mubr.f32.gmra.mrb[0].mxu0 %v1431
      %v1533 = vpop.f32.mrb[0].mxu0
      %v1534 = vadd.f32 %v1460, %v1533
      %v1535 = vpop.f32.mrb[0].mxu0
      %1536 = vmatprep.mubr.f32.mxu0 0.0
      %1537 = vmatmul.mubr.f32.gmra.mrb[0].mxu0 %v1432
      %v1538 = vpop.f32.mrb[0].mxu0
      %v1539 = vadd.f32 %v1460, %v1538
      %v1540 = vpop.f32.mrb[0].mxu0
      %1541 = vmatprep.mubr.f32.mxu0 0.0
      %1542 = vmatmul.mubr.f32.gmra.mrb[0].mxu0 %v1433
      %v1543 = vpop.f32.mrb[0].mxu0
      %v1544 = vadd.f32 %v1460, %v1543
      %v1545 = vpop.f32.mrb[0].mxu0
      %1546 = vmatprep.mubr.f32.mxu0 0.0
      %1547 = vmatmul.mubr.f32.gmra.mrb[0].mxu0 %v1434
      %v1548 = vpop.f32.mrb[0].mxu0
      %v1549 = vadd.f32 %v1460, %v1548
      %v1550 = vpop.f32.mrb[0].mxu0
      %1551 = vmatprep.mubr.f32.mxu0 0.0
      %1552 = vmatmul.mubr.f32.gmra.mrb[0].mxu0 %v1435
      %v1553 = vpop.f32.mrb[0].mxu0
      %v1554 = vadd.f32 %v1460, %v1553
      %v1555 = vpop.f32.mrb[0].mxu0
      %1556 = vmatprep.mubr.f32.mxu0 0.0
      %1557 = vmatmul.mubr.f32.gmra.mrb[0].mxu0 %v1436
      %v1558 = vpop.f32.mrb[0].mxu0
      %v1559 = vadd.f32 %v1460, %v1558
      %v1560 = vpop.f32.mrb[0].mxu0
      %1561 = vmatprep.mubr.f32.mxu0 0.0
      %1562 = vmatmul.mubr.f32.gmra.mrb[0].mxu0 %v1437
      %v1563 = vpop.f32.mrb[0].mxu0
      %v1564 = vadd.f32 %v1460, %v1563
      %v1565 = vpop.f32.mrb[0].mxu0
      %1566 = vdwg.mxu0
      %v1567 = vmax.f32 %v1529, 0.0
      %v1568 = vmax.f32 %v1534, 0.0
      %v1569 = vmax.f32 %v1539, 0.0
      %v1570 = vmax.f32 %v1544, 0.0
      %v1571 = vmax.f32 %v1549, 0.0
      %v1572 = vmax.f32 %v1554, 0.0
      %v1573 = vmax.f32 %v1559, 0.0
      %v1574 = vmax.f32 %v1564, 0.0
      %s1575 = scalar_lea.vmem %s5, 128
      %v1576 = vld [vmem:[%s1575] sm:$0xff]
      %v1577 = vld [vmem:[%s1575 + $0x8] sm:$0xff]
      %v1578 = vld [vmem:[%s1575 + $0x10] sm:$0xff]
      %v1579 = vld [vmem:[%s1575 + $0x18] sm:$0xff]
      %v1580 = vld [vmem:[%s1575 + $0x20] sm:$0xff]
      %v1581 = vld [vmem:[%s1575 + $0x28] sm:$0xff]
      %v1582 = vld [vmem:[%s1575 + $0x30] sm:$0xff]
      %v1583 = vld [vmem:[%s1575 + $0x38] sm:$0xff]
      %v1584 = vld [vmem:[%s1575 + $0x40] sm:$0xff]
      %v1585 = vld [vmem:[%s1575 + $0x48] sm:$0xff]
      %v1586 = vld [vmem:[%s1575 + $0x50] sm:$0xff]
      %v1587 = vld [vmem:[%s1575 + $0x58] sm:$0xff]
      %v1588 = vld [vmem:[%s1575 + $0x60] sm:$0xff]
      %v1589 = vld [vmem:[%s1575 + $0x68] sm:$0xff]
      %v1590 = vld [vmem:[%s1575 + $0x70] sm:$0xff]
      %v1591 = vld [vmem:[%s1575 + $0x78] sm:$0xff]
      %s1592 = scalar_lea.vmem %s7, 7
      %v1593 = vld [vmem:[%s1592] ss:$8 sm:$0x3]
      %v1595 = vlaneseq
      %v1596 = vshrl.u32 %v1595, 7
      %v1597 = vsub.s32 0, %v1596
      %v1598 = vrot.slane %v1593, %v1597
      %1600 = vmatprep.subr.mxu0 0.0
      %1601 = vmatpush1.msra.mxu0 %v1576
      %1602 = vmatprep.subr.mxu0 0.0
      %1603 = vmatpush1.msra.mxu0 %v1577
      %1604 = vmatprep.subr.mxu0 0.0
      %1605 = vmatpush1.msra.mxu0 %v1578
      %1606 = vmatprep.subr.mxu0 0.0
      %1607 = vmatpush1.msra.mxu0 %v1579
      %1608 = vmatprep.subr.mxu0 0.0
      %1609 = vmatpush1.msra.mxu0 %v1580
      %1610 = vmatprep.subr.mxu0 0.0
      %1611 = vmatpush1.msra.mxu0 %v1581
      %1612 = vmatprep.subr.mxu0 0.0
      %1613 = vmatpush1.msra.mxu0 %v1582
      %1614 = vmatprep.subr.mxu0 0.0
      %1615 = vmatpush1.msra.mxu0 %v1583
      %1616 = vmatprep.subr.mxu0 0.0
      %1617 = vmatpush1.msra.mxu0 %v1584
      %1618 = vmatprep.subr.mxu0 0.0
      %1619 = vmatpush1.msra.mxu0 %v1585
      %1620 = vmatprep.subr.mxu0 0.0
      %1621 = vmatpush1.msra.mxu0 %v1586
      %1622 = vmatprep.subr.mxu0 0.0
      %1623 = vmatpush1.msra.mxu0 %v1587
      %1624 = vmatprep.subr.mxu0 0.0
      %1625 = vmatpush1.msra.mxu0 %v1588
      %1626 = vmatprep.subr.mxu0 0.0
      %1627 = vmatpush1.msra.mxu0 %v1589
      %1628 = vmatprep.subr.mxu0 0.0
      %1629 = vmatpush1.msra.mxu0 %v1590
      %1630 = vmatprep.subr.mxu0 0.0
      %1631 = vmatpush1.msra.mxu0 %v1591
      %1632 = vmatprep.subr.mxu0 0.0
      %1633 = vmatpush1.msra.mxu0 0.0
      %1634 = vmatprep.subr.mxu0 0.0
      %1635 = vmatpush1.msra.mxu0 0.0
      %1636 = vmatprep.subr.mxu0 0.0
      %1637 = vmatpush1.msra.mxu0 0.0
      %1638 = vmatprep.subr.mxu0 0.0
      %1639 = vmatpush1.msra.mxu0 0.0
      %1640 = vmatprep.subr.mxu0 0.0
      %1641 = vmatpush1.msra.mxu0 0.0
      %1642 = vmatprep.subr.mxu0 0.0
      %1643 = vmatpush1.msra.mxu0 0.0
      %1644 = vmatprep.subr.mxu0 0.0
      %1645 = vmatpush1.msra.mxu0 0.0
      %1646 = vmatprep.subr.mxu0 0.0
      %1647 = vmatpush1.msra.mxu0 0.0
      %1648 = vmatprep.subr.mxu0 0.0
      %1649 = vmatpush1.msra.mxu0 0.0
      %1650 = vmatprep.subr.mxu0 0.0
      %1651 = vmatpush1.msra.mxu0 0.0
      %1652 = vmatprep.subr.mxu0 0.0
      %1653 = vmatpush1.msra.mxu0 0.0
      %1654 = vmatprep.subr.mxu0 0.0
      %1655 = vmatpush1.msra.mxu0 0.0
      %1656 = vmatprep.subr.mxu0 0.0
      %1657 = vmatpush1.msra.mxu0 0.0
      %1658 = vmatprep.subr.mxu0 0.0
      %1659 = vmatpush1.msra.mxu0 0.0
      %1660 = vmatprep.subr.mxu0 0.0
      %1661 = vmatpush1.msra.mxu0 0.0
      %1662 = vmatprep.subr.mxu0 0.0
      %1663 = vmatpush1.msra.mxu0 0.0
      %1664 = vmatprep.mubr.f32.mxu0 0.0
      %1665 = vmatmul.mubr.f32.gmra.mrb[0].mxu0 %v1567
      %v1666 = vpop.f32.mrb[0].mxu0
      %v1667 = vadd.f32 %v1598, %v1666
      %v1668 = vpop.f32.mrb[0].mxu0
      %1669 = vmatprep.mubr.f32.mxu0 0.0
      %1670 = vmatmul.mubr.f32.gmra.mrb[0].mxu0 %v1568
      %v1671 = vpop.f32.mrb[0].mxu0
      %v1672 = vadd.f32 %v1598, %v1671
      %v1673 = vpop.f32.mrb[0].mxu0
      %1674 = vmatprep.mubr.f32.mxu0 0.0
      %1675 = vmatmul.mubr.f32.gmra.mrb[0].mxu0 %v1569
      %v1676 = vpop.f32.mrb[0].mxu0
      %v1677 = vadd.f32 %v1598, %v1676
      %v1678 = vpop.f32.mrb[0].mxu0
      %1679 = vmatprep.mubr.f32.mxu0 0.0
      %1680 = vmatmul.mubr.f32.gmra.mrb[0].mxu0 %v1570
      %v1681 = vpop.f32.mrb[0].mxu0
      %v1682 = vadd.f32 %v1598, %v1681
      %v1683 = vpop.f32.mrb[0].mxu0
      %1684 = vmatprep.mubr.f32.mxu0 0.0
      %1685 = vmatmul.mubr.f32.gmra.mrb[0].mxu0 %v1571
      %v1686 = vpop.f32.mrb[0].mxu0
      %v1687 = vadd.f32 %v1598, %v1686
      %v1688 = vpop.f32.mrb[0].mxu0
      %1689 = vmatprep.mubr.f32.mxu0 0.0
      %1690 = vmatmul.mubr.f32.gmra.mrb[0].mxu0 %v1572
      %v1691 = vpop.f32.mrb[0].mxu0
      %v1692 = vadd.f32 %v1598, %v1691
      %v1693 = vpop.f32.mrb[0].mxu0
      %1694 = vmatprep.mubr.f32.mxu0 0.0
      %1695 = vmatmul.mubr.f32.gmra.mrb[0].mxu0 %v1573
      %v1696 = vpop.f32.mrb[0].mxu0
      %v1697 = vadd.f32 %v1598, %v1696
      %v1698 = vpop.f32.mrb[0].mxu0
      %1699 = vmatprep.mubr.f32.mxu0 0.0
      %1700 = vmatmul.mubr.f32.gmra.mrb[0].mxu0 %v1574
      %v1701 = vpop.f32.mrb[0].mxu0
      %v1702 = vadd.f32 %v1598, %v1701
      %v1703 = vpop.f32.mrb[0].mxu0
      %1704 = vdwg.mxu0
      %v1705 = vmax.f32 %v1667, 0.0
      %v1706 = vmax.f32 %v1672, 0.0
      %v1707 = vmax.f32 %v1677, 0.0
      %v1708 = vmax.f32 %v1682, 0.0
      %v1709 = vmax.f32 %v1687, 0.0
      %v1710 = vmax.f32 %v1692, 0.0
      %v1711 = vmax.f32 %v1697, 0.0
      %v1712 = vmax.f32 %v1702, 0.0
      %s1713 = scalar_lea.vmem %s5, 256
      %v1714 = vld [vmem:[%s1713] sm:$0xff]
      %v1715 = vld [vmem:[%s1713 + $0x8] sm:$0xff]
      %v1716 = vld [vmem:[%s1713 + $0x10] sm:$0xff]
      %v1717 = vld [vmem:[%s1713 + $0x18] sm:$0xff]
      %v1718 = vld [vmem:[%s1713 + $0x20] sm:$0xff]
      %v1719 = vld [vmem:[%s1713 + $0x28] sm:$0xff]
      %v1720 = vld [vmem:[%s1713 + $0x30] sm:$0xff]
      %v1721 = vld [vmem:[%s1713 + $0x38] sm:$0xff]
      %v1722 = vld [vmem:[%s1713 + $0x40] sm:$0xff]
      %v1723 = vld [vmem:[%s1713 + $0x48] sm:$0xff]
      %v1724 = vld [vmem:[%s1713 + $0x50] sm:$0xff]
      %v1725 = vld [vmem:[%s1713 + $0x58] sm:$0xff]
      %v1726 = vld [vmem:[%s1713 + $0x60] sm:$0xff]
      %v1727 = vld [vmem:[%s1713 + $0x68] sm:$0xff]
      %v1728 = vld [vmem:[%s1713 + $0x70] sm:$0xff]
      %v1729 = vld [vmem:[%s1713 + $0x78] sm:$0xff]
      %s1730 = scalar_lea.vmem %s7, 16
      %v1731 = vld [vmem:[%s1730] ss:$8 sm:$0x3]
      %v1733 = vlaneseq
      %v1734 = vshrl.u32 %v1733, 7
      %v1735 = vsub.s32 0, %v1734
      %v1736 = vrot.slane %v1731, %v1735
      %1738 = vmatprep.subr.mxu0 0.0
      %1739 = vmatpush1.msra.mxu0 %v1714
      %1740 = vmatprep.subr.mxu0 0.0
      %1741 = vmatpush1.msra.mxu0 %v1715
      %1742 = vmatprep.subr.mxu0 0.0
      %1743 = vmatpush1.msra.mxu0 %v1716
      %1744 = vmatprep.subr.mxu0 0.0
      %1745 = vmatpush1.msra.mxu0 %v1717
      %1746 = vmatprep.subr.mxu0 0.0
      %1747 = vmatpush1.msra.mxu0 %v1718
      %1748 = vmatprep.subr.mxu0 0.0
      %1749 = vmatpush1.msra.mxu0 %v1719
      %1750 = vmatprep.subr.mxu0 0.0
      %1751 = vmatpush1.msra.mxu0 %v1720
      %1752 = vmatprep.subr.mxu0 0.0
      %1753 = vmatpush1.msra.mxu0 %v1721
      %1754 = vmatprep.subr.mxu0 0.0
      %1755 = vmatpush1.msra.mxu0 %v1722
      %1756 = vmatprep.subr.mxu0 0.0
      %1757 = vmatpush1.msra.mxu0 %v1723
      %1758 = vmatprep.subr.mxu0 0.0
      %1759 = vmatpush1.msra.mxu0 %v1724
      %1760 = vmatprep.subr.mxu0 0.0
      %1761 = vmatpush1.msra.mxu0 %v1725
      %1762 = vmatprep.subr.mxu0 0.0
      %1763 = vmatpush1.msra.mxu0 %v1726
      %1764 = vmatprep.subr.mxu0 0.0
      %1765 = vmatpush1.msra.mxu0 %v1727
      %1766 = vmatprep.subr.mxu0 0.0
      %1767 = vmatpush1.msra.mxu0 %v1728
      %1768 = vmatprep.subr.mxu0 0.0
      %1769 = vmatpush1.msra.mxu0 %v1729
      %1770 = vmatprep.subr.mxu0 0.0
      %1771 = vmatpush1.msra.mxu0 0.0
      %1772 = vmatprep.subr.mxu0 0.0
      %1773 = vmatpush1.msra.mxu0 0.0
      %1774 = vmatprep.subr.mxu0 0.0
      %1775 = vmatpush1.msra.mxu0 0.0
      %1776 = vmatprep.subr.mxu0 0.0
      %1777 = vmatpush1.msra.mxu0 0.0
      %1778 = vmatprep.subr.mxu0 0.0
      %1779 = vmatpush1.msra.mxu0 0.0
      %1780 = vmatprep.subr.mxu0 0.0
      %1781 = vmatpush1.msra.mxu0 0.0
      %1782 = vmatprep.subr.mxu0 0.0
      %1783 = vmatpush1.msra.mxu0 0.0
      %1784 = vmatprep.subr.mxu0 0.0
      %1785 = vmatpush1.msra.mxu0 0.0
      %1786 = vmatprep.subr.mxu0 0.0
      %1787 = vmatpush1.msra.mxu0 0.0
      %1788 = vmatprep.subr.mxu0 0.0
      %1789 = vmatpush1.msra.mxu0 0.0
      %1790 = vmatprep.subr.mxu0 0.0
      %1791 = vmatpush1.msra.mxu0 0.0
      %1792 = vmatprep.subr.mxu0 0.0
      %1793 = vmatpush1.msra.mxu0 0.0
      %1794 = vmatprep.subr.mxu0 0.0
      %1795 = vmatpush1.msra.mxu0 0.0
      %1796 = vmatprep.subr.mxu0 0.0
      %1797 = vmatpush1.msra.mxu0 0.0
      %1798 = vmatprep.subr.mxu0 0.0
      %1799 = vmatpush1.msra.mxu0 0.0
      %1800 = vmatprep.subr.mxu0 0.0
      %1801 = vmatpush1.msra.mxu0 0.0
      %1802 = vmatprep.mubr.f32.mxu0 0.0
      %1803 = vmatmul.mubr.f32.gmra.mrb[0].mxu0 %v1705
      %v1804 = vpop.f32.mrb[0].mxu0
      %v1805 = vadd.f32 %v1736, %v1804
      %v1806 = vpop.f32.mrb[0].mxu0
      %1807 = vmatprep.mubr.f32.mxu0 0.0
      %1808 = vmatmul.mubr.f32.gmra.mrb[0].mxu0 %v1706
      %v1809 = vpop.f32.mrb[0].mxu0
      %v1810 = vadd.f32 %v1736, %v1809
      %v1811 = vpop.f32.mrb[0].mxu0
      %1812 = vmatprep.mubr.f32.mxu0 0.0
      %1813 = vmatmul.mubr.f32.gmra.mrb[0].mxu0 %v1707
      %v1814 = vpop.f32.mrb[0].mxu0
      %v1815 = vadd.f32 %v1736, %v1814
      %v1816 = vpop.f32.mrb[0].mxu0
      %1817 = vmatprep.mubr.f32.mxu0 0.0
      %1818 = vmatmul.mubr.f32.gmra.mrb[0].mxu0 %v1708
      %v1819 = vpop.f32.mrb[0].mxu0
      %v1820 = vadd.f32 %v1736, %v1819
      %v1821 = vpop.f32.mrb[0].mxu0
      %1822 = vmatprep.mubr.f32.mxu0 0.0
      %1823 = vmatmul.mubr.f32.gmra.mrb[0].mxu0 %v1709
      %v1824 = vpop.f32.mrb[0].mxu0
      %v1825 = vadd.f32 %v1736, %v1824
      %v1826 = vpop.f32.mrb[0].mxu0
      %1827 = vmatprep.mubr.f32.mxu0 0.0
      %1828 = vmatmul.mubr.f32.gmra.mrb[0].mxu0 %v1710
      %v1829 = vpop.f32.mrb[0].mxu0
      %v1830 = vadd.f32 %v1736, %v1829
      %v1831 = vpop.f32.mrb[0].mxu0
      %1832 = vmatprep.mubr.f32.mxu0 0.0
      %1833 = vmatmul.mubr.f32.gmra.mrb[0].mxu0 %v1711
      %v1834 = vpop.f32.mrb[0].mxu0
      %v1835 = vadd.f32 %v1736, %v1834
      %v1836 = vpop.f32.mrb[0].mxu0
      %1837 = vmatprep.mubr.f32.mxu0 0.0
      %1838 = vmatmul.mubr.f32.gmra.mrb[0].mxu0 %v1712
      %v1839 = vpop.f32.mrb[0].mxu0
      %v1840 = vadd.f32 %v1736, %v1839
      %v1841 = vpop.f32.mrb[0].mxu0
      %1842 = vdwg.mxu0
      %v1843 = vmax.f32 %v1805, 0.0
      %v1844 = vmax.f32 %v1810, 0.0
      %v1845 = vmax.f32 %v1815, 0.0
      %v1846 = vmax.f32 %v1820, 0.0
      %v1847 = vmax.f32 %v1825, 0.0
      %v1848 = vmax.f32 %v1830, 0.0
      %v1849 = vmax.f32 %v1835, 0.0
      %v1850 = vmax.f32 %v1840, 0.0
      %s1851 = scalar_lea.vmem %s5, 384
      %v1852 = vld [vmem:[%s1851] sm:$0xff]
      %v1853 = vld [vmem:[%s1851 + $0x8] sm:$0xff]
      %v1854 = vld [vmem:[%s1851 + $0x10] sm:$0xff]
      %v1855 = vld [vmem:[%s1851 + $0x18] sm:$0xff]
      %v1856 = vld [vmem:[%s1851 + $0x20] sm:$0xff]
      %v1857 = vld [vmem:[%s1851 + $0x28] sm:$0xff]
      %v1858 = vld [vmem:[%s1851 + $0x30] sm:$0xff]
      %v1859 = vld [vmem:[%s1851 + $0x38] sm:$0xff]
      %v1860 = vld [vmem:[%s1851 + $0x40] sm:$0xff]
      %v1861 = vld [vmem:[%s1851 + $0x48] sm:$0xff]
      %v1862 = vld [vmem:[%s1851 + $0x50] sm:$0xff]
      %v1863 = vld [vmem:[%s1851 + $0x58] sm:$0xff]
      %v1864 = vld [vmem:[%s1851 + $0x60] sm:$0xff]
      %v1865 = vld [vmem:[%s1851 + $0x68] sm:$0xff]
      %v1866 = vld [vmem:[%s1851 + $0x70] sm:$0xff]
      %v1867 = vld [vmem:[%s1851 + $0x78] sm:$0xff]
      %s1868 = scalar_lea.vmem %s7, 17
      %v1869 = vld [vmem:[%s1868] ss:$8 sm:$0x3]
      %v1871 = vlaneseq
      %v1872 = vshrl.u32 %v1871, 7
      %v1873 = vsub.s32 0, %v1872
      %v1874 = vrot.slane %v1869, %v1873
      %1876 = vmatprep.subr.mxu0 0.0
      %1877 = vmatpush1.msra.mxu0 %v1852
      %1878 = vmatprep.subr.mxu0 0.0
      %1879 = vmatpush1.msra.mxu0 %v1853
      %1880 = vmatprep.subr.mxu0 0.0
      %1881 = vmatpush1.msra.mxu0 %v1854
      %1882 = vmatprep.subr.mxu0 0.0
      %1883 = vmatpush1.msra.mxu0 %v1855
      %1884 = vmatprep.subr.mxu0 0.0
      %1885 = vmatpush1.msra.mxu0 %v1856
      %1886 = vmatprep.subr.mxu0 0.0
      %1887 = vmatpush1.msra.mxu0 %v1857
      %1888 = vmatprep.subr.mxu0 0.0
      %1889 = vmatpush1.msra.mxu0 %v1858
      %1890 = vmatprep.subr.mxu0 0.0
      %1891 = vmatpush1.msra.mxu0 %v1859
      %1892 = vmatprep.subr.mxu0 0.0
      %1893 = vmatpush1.msra.mxu0 %v1860
      %1894 = vmatprep.subr.mxu0 0.0
      %1895 = vmatpush1.msra.mxu0 %v1861
      %1896 = vmatprep.subr.mxu0 0.0
      %1897 = vmatpush1.msra.mxu0 %v1862
      %1898 = vmatprep.subr.mxu0 0.0
      %1899 = vmatpush1.msra.mxu0 %v1863
      %1900 = vmatprep.subr.mxu0 0.0
      %1901 = vmatpush1.msra.mxu0 %v1864
      %1902 = vmatprep.subr.mxu0 0.0
      %1903 = vmatpush1.msra.mxu0 %v1865
      %1904 = vmatprep.subr.mxu0 0.0
      %1905 = vmatpush1.msra.mxu0 %v1866
      %1906 = vmatprep.subr.mxu0 0.0
      %1907 = vmatpush1.msra.mxu0 %v1867
      %1908 = vmatprep.subr.mxu0 0.0
      %1909 = vmatpush1.msra.mxu0 0.0
      %1910 = vmatprep.subr.mxu0 0.0
      %1911 = vmatpush1.msra.mxu0 0.0
      %1912 = vmatprep.subr.mxu0 0.0
      %1913 = vmatpush1.msra.mxu0 0.0
      %1914 = vmatprep.subr.mxu0 0.0
      %1915 = vmatpush1.msra.mxu0 0.0
      %1916 = vmatprep.subr.mxu0 0.0
      %1917 = vmatpush1.msra.mxu0 0.0
      %1918 = vmatprep.subr.mxu0 0.0
      %1919 = vmatpush1.msra.mxu0 0.0
      %1920 = vmatprep.subr.mxu0 0.0
      %1921 = vmatpush1.msra.mxu0 0.0
      %1922 = vmatprep.subr.mxu0 0.0
      %1923 = vmatpush1.msra.mxu0 0.0
      %1924 = vmatprep.subr.mxu0 0.0
      %1925 = vmatpush1.msra.mxu0 0.0
      %1926 = vmatprep.subr.mxu0 0.0
      %1927 = vmatpush1.msra.mxu0 0.0
      %1928 = vmatprep.subr.mxu0 0.0
      %1929 = vmatpush1.msra.mxu0 0.0
      %1930 = vmatprep.subr.mxu0 0.0
      %1931 = vmatpush1.msra.mxu0 0.0
      %1932 = vmatprep.subr.mxu0 0.0
      %1933 = vmatpush1.msra.mxu0 0.0
      %1934 = vmatprep.subr.mxu0 0.0
      %1935 = vmatpush1.msra.mxu0 0.0
      %1936 = vmatprep.subr.mxu0 0.0
      %1937 = vmatpush1.msra.mxu0 0.0
      %1938 = vmatprep.subr.mxu0 0.0
      %1939 = vmatpush1.msra.mxu0 0.0
      %1940 = vmatprep.mubr.f32.mxu0 0.0
      %1941 = vmatmul.mubr.f32.gmra.mrb[0].mxu0 %v1843
      %v1942 = vpop.f32.mrb[0].mxu0
      %v1943 = vadd.f32 %v1874, %v1942
      %v1944 = vpop.f32.mrb[0].mxu0
      %1945 = vmatprep.mubr.f32.mxu0 0.0
      %1946 = vmatmul.mubr.f32.gmra.mrb[0].mxu0 %v1844
      %v1947 = vpop.f32.mrb[0].mxu0
      %v1948 = vadd.f32 %v1874, %v1947
      %v1949 = vpop.f32.mrb[0].mxu0
      %1950 = vmatprep.mubr.f32.mxu0 0.0
      %1951 = vmatmul.mubr.f32.gmra.mrb[0].mxu0 %v1845
      %v1952 = vpop.f32.mrb[0].mxu0
      %v1953 = vadd.f32 %v1874, %v1952
      %v1954 = vpop.f32.mrb[0].mxu0
      %1955 = vmatprep.mubr.f32.mxu0 0.0
      %1956 = vmatmul.mubr.f32.gmra.mrb[0].mxu0 %v1846
      %v1957 = vpop.f32.mrb[0].mxu0
      %v1958 = vadd.f32 %v1874, %v1957
      %v1959 = vpop.f32.mrb[0].mxu0
      %1960 = vmatprep.mubr.f32.mxu0 0.0
      %1961 = vmatmul.mubr.f32.gmra.mrb[0].mxu0 %v1847
      %v1962 = vpop.f32.mrb[0].mxu0
      %v1963 = vadd.f32 %v1874, %v1962
      %v1964 = vpop.f32.mrb[0].mxu0
      %1965 = vmatprep.mubr.f32.mxu0 0.0
      %1966 = vmatmul.mubr.f32.gmra.mrb[0].mxu0 %v1848
      %v1967 = vpop.f32.mrb[0].mxu0
      %v1968 = vadd.f32 %v1874, %v1967
      %v1969 = vpop.f32.mrb[0].mxu0
      %1970 = vmatprep.mubr.f32.mxu0 0.0
      %1971 = vmatmul.mubr.f32.gmra.mrb[0].mxu0 %v1849
      %v1972 = vpop.f32.mrb[0].mxu0
      %v1973 = vadd.f32 %v1874, %v1972
      %v1974 = vpop.f32.mrb[0].mxu0
      %1975 = vmatprep.mubr.f32.mxu0 0.0
      %1976 = vmatmul.mubr.f32.gmra.mrb[0].mxu0 %v1850
      %v1977 = vpop.f32.mrb[0].mxu0
      %v1978 = vadd.f32 %v1874, %v1977
      %v1979 = vpop.f32.mrb[0].mxu0
      %1980 = vdwg.mxu0
      %v1981 = vmax.f32 %v1943, 0.0
      %v1982 = vmax.f32 %v1948, 0.0
      %v1983 = vmax.f32 %v1953, 0.0
      %v1984 = vmax.f32 %v1958, 0.0
      %v1985 = vmax.f32 %v1963, 0.0
      %v1986 = vmax.f32 %v1968, 0.0
      %v1987 = vmax.f32 %v1973, 0.0
      %v1988 = vmax.f32 %v1978, 0.0
      %v1989 = vld [vmem:[%s6] sm:$0xff]
      %v1990 = vld [vmem:[%s6 + $0x8] sm:$0xff]
      %v1991 = vld [vmem:[%s6 + $0x10] sm:$0xff]
      %v1992 = vld [vmem:[%s6 + $0x18] sm:$0xff]
      %v1993 = vld [vmem:[%s6 + $0x20] sm:$0xff]
      %v1994 = vld [vmem:[%s6 + $0x28] sm:$0xff]
      %v1995 = vld [vmem:[%s6 + $0x30] sm:$0xff]
      %v1996 = vld [vmem:[%s6 + $0x38] sm:$0xff]
      %v1997 = vld [vmem:[%s6 + $0x40] sm:$0xff]
      %v1998 = vld [vmem:[%s6 + $0x48] sm:$0xff]
      %v1999 = vld [vmem:[%s6 + $0x50] sm:$0xff]
      %v2000 = vld [vmem:[%s6 + $0x58] sm:$0xff]
      %v2001 = vld [vmem:[%s6 + $0x60] sm:$0xff]
      %v2002 = vld [vmem:[%s6 + $0x68] sm:$0xff]
      %v2003 = vld [vmem:[%s6 + $0x70] sm:$0xff]
      %v2004 = vld [vmem:[%s6 + $0x78] sm:$0xff]
      %s2005 = scalar_lea.vmem %s7, 18
      %v2006 = vld [vmem:[%s2005] ss:$8 sm:$0x3]
      %v2008 = vlaneseq
      %v2009 = vshrl.u32 %v2008, 7
      %v2010 = vsub.s32 0, %v2009
      %v2011 = vrot.slane %v2006, %v2010
      %2013 = vmatprep.subr.mxu0 0.0
      %2014 = vmatpush1.msra.mxu0 %v1989
      %2015 = vmatprep.subr.mxu0 0.0
      %2016 = vmatpush1.msra.mxu0 %v1990
      %2017 = vmatprep.subr.mxu0 0.0
      %2018 = vmatpush1.msra.mxu0 %v1991
      %2019 = vmatprep.subr.mxu0 0.0
      %2020 = vmatpush1.msra.mxu0 %v1992
      %2021 = vmatprep.subr.mxu0 0.0
      %2022 = vmatpush1.msra.mxu0 %v1993
      %2023 = vmatprep.subr.mxu0 0.0
      %2024 = vmatpush1.msra.mxu0 %v1994
      %2025 = vmatprep.subr.mxu0 0.0
      %2026 = vmatpush1.msra.mxu0 %v1995
      %2027 = vmatprep.subr.mxu0 0.0
      %2028 = vmatpush1.msra.mxu0 %v1996
      %2029 = vmatprep.subr.mxu0 0.0
      %2030 = vmatpush1.msra.mxu0 %v1997
      %2031 = vmatprep.subr.mxu0 0.0
      %2032 = vmatpush1.msra.mxu0 %v1998
      %2033 = vmatprep.subr.mxu0 0.0
      %2034 = vmatpush1.msra.mxu0 %v1999
      %2035 = vmatprep.subr.mxu0 0.0
      %2036 = vmatpush1.msra.mxu0 %v2000
      %2037 = vmatprep.subr.mxu0 0.0
      %2038 = vmatpush1.msra.mxu0 %v2001
      %2039 = vmatprep.subr.mxu0 0.0
      %2040 = vmatpush1.msra.mxu0 %v2002
      %2041 = vmatprep.subr.mxu0 0.0
      %2042 = vmatpush1.msra.mxu0 %v2003
      %2043 = vmatprep.subr.mxu0 0.0
      %2044 = vmatpush1.msra.mxu0 %v2004
      %2045 = vmatprep.subr.mxu0 0.0
      %2046 = vmatpush1.msra.mxu0 0.0
      %2047 = vmatprep.subr.mxu0 0.0
      %2048 = vmatpush1.msra.mxu0 0.0
      %2049 = vmatprep.subr.mxu0 0.0
      %2050 = vmatpush1.msra.mxu0 0.0
      %2051 = vmatprep.subr.mxu0 0.0
      %2052 = vmatpush1.msra.mxu0 0.0
      %2053 = vmatprep.subr.mxu0 0.0
      %2054 = vmatpush1.msra.mxu0 0.0
      %2055 = vmatprep.subr.mxu0 0.0
      %2056 = vmatpush1.msra.mxu0 0.0
      %2057 = vmatprep.subr.mxu0 0.0
      %2058 = vmatpush1.msra.mxu0 0.0
      %2059 = vmatprep.subr.mxu0 0.0
      %2060 = vmatpush1.msra.mxu0 0.0
      %2061 = vmatprep.subr.mxu0 0.0
      %2062 = vmatpush1.msra.mxu0 0.0
      %2063 = vmatprep.subr.mxu0 0.0
      %2064 = vmatpush1.msra.mxu0 0.0
      %2065 = vmatprep.subr.mxu0 0.0
      %2066 = vmatpush1.msra.mxu0 0.0
      %2067 = vmatprep.subr.mxu0 0.0
      %2068 = vmatpush1.msra.mxu0 0.0
      %2069 = vmatprep.subr.mxu0 0.0
      %2070 = vmatpush1.msra.mxu0 0.0
      %2071 = vmatprep.subr.mxu0 0.0
      %2072 = vmatpush1.msra.mxu0 0.0
      %2073 = vmatprep.subr.mxu0 0.0
      %2074 = vmatpush1.msra.mxu0 0.0
      %2075 = vmatprep.subr.mxu0 0.0
      %2076 = vmatpush1.msra.mxu0 0.0
      %2077 = vmatprep.mubr.f32.mxu0 0.0
      %2078 = vmatmul.mubr.f32.gmra.mrb[0].mxu0 %v1981
      %v2079 = vpop.f32.mrb[0].mxu0
      %v2080 = vadd.f32 %v2011, %v2079
      %v2081 = vpop.f32.mrb[0].mxu0
      %2082 = vmatprep.mubr.f32.mxu0 0.0
      %2083 = vmatmul.mubr.f32.gmra.mrb[0].mxu0 %v1982
      %v2084 = vpop.f32.mrb[0].mxu0
      %v2085 = vadd.f32 %v2011, %v2084
      %v2086 = vpop.f32.mrb[0].mxu0
      %2087 = vmatprep.mubr.f32.mxu0 0.0
      %2088 = vmatmul.mubr.f32.gmra.mrb[0].mxu0 %v1983
      %v2089 = vpop.f32.mrb[0].mxu0
      %v2090 = vadd.f32 %v2011, %v2089
      %v2091 = vpop.f32.mrb[0].mxu0
      %2092 = vmatprep.mubr.f32.mxu0 0.0
      %2093 = vmatmul.mubr.f32.gmra.mrb[0].mxu0 %v1984
      %v2094 = vpop.f32.mrb[0].mxu0
      %v2095 = vadd.f32 %v2011, %v2094
      %v2096 = vpop.f32.mrb[0].mxu0
      %2097 = vmatprep.mubr.f32.mxu0 0.0
      %2098 = vmatmul.mubr.f32.gmra.mrb[0].mxu0 %v1985
      %v2099 = vpop.f32.mrb[0].mxu0
      %v2100 = vadd.f32 %v2011, %v2099
      %v2101 = vpop.f32.mrb[0].mxu0
      %2102 = vmatprep.mubr.f32.mxu0 0.0
      %2103 = vmatmul.mubr.f32.gmra.mrb[0].mxu0 %v1986
      %v2104 = vpop.f32.mrb[0].mxu0
      %v2105 = vadd.f32 %v2011, %v2104
      %v2106 = vpop.f32.mrb[0].mxu0
      %2107 = vmatprep.mubr.f32.mxu0 0.0
      %2108 = vmatmul.mubr.f32.gmra.mrb[0].mxu0 %v1987
      %v2109 = vpop.f32.mrb[0].mxu0
      %v2110 = vadd.f32 %v2011, %v2109
      %v2111 = vpop.f32.mrb[0].mxu0
      %2112 = vmatprep.mubr.f32.mxu0 0.0
      %2113 = vmatmul.mubr.f32.gmra.mrb[0].mxu0 %v1988
      %v2114 = vpop.f32.mrb[0].mxu0
      %v2115 = vadd.f32 %v2011, %v2114
      %v2116 = vpop.f32.mrb[0].mxu0
      %2117 = vdwg.mxu0
      %vm2118 = vcmask 97280
      %2119 = vst.msk [vmem:[%s307] sm:$0xff] %vm2118, %v2080
      %2120 = vst.msk [vmem:[%s307 + $0x8] sm:$0xff] %vm2118, %v2085
      %2121 = vst.msk [vmem:[%s307 + $0x10] sm:$0xff] %vm2118, %v2090
      %2122 = vst.msk [vmem:[%s307 + $0x18] sm:$0xff] %vm2118, %v2095
      %2123 = vst.msk [vmem:[%s307 + $0x20] sm:$0xff] %vm2118, %v2100
      %2124 = vst.msk [vmem:[%s307 + $0x28] sm:$0xff] %vm2118, %v2105
      %2125 = vst.msk [vmem:[%s307 + $0x30] sm:$0xff] %vm2118, %v2110
      %2126 = vst.msk [vmem:[%s307 + $0x38] sm:$0xff] %vm2118, %v2115
      %s2127 = smul.u32 8, %s19
      %p2128 = scmp.lt.s32.totalorder %s2127, 31
      %s2129 = scalar_select %p2128, %s2127, 31
      %s2130 = smul.addr %s2129, 8
      %s2131 = scalar_lea.vmem %s8, %s2130
      // Predicated region
      $region53: #{h_theta_adain_forward.1} parent=51 // pred_check
        %p2132 = pneg %p210
      $region54: #{h_theta_adain_forward.1} parent=51 // pred_check_branch
        %2134 = sbr.rel (%p2132) target = $region56
      $region55: #{h_theta_adain_forward.1} parent=51 // pred_region
        %s2135 = smul.u32 8, %s19
      $region56: #{h_theta_adain_forward.1} parent=51 // pred_fallthru
        _
    $region52: #{h_theta_adain_forward.1} parent=5 // pred_fallthru
      _
    %p2136 = scmp.le.s32.totalorder 2, %s14
    // Predicated region
    $region57: #{h_theta_adain_forward.1} parent=5 // pred_check
      %p2137 = pneg %p2136
    $region58: #{h_theta_adain_forward.1} parent=5 // pred_check_branch
      %2139 = sbr.rel (%p2137) target = $region60
    $region59: #{h_theta_adain_forward.1} parent=5 // pred_region
      %s2140 = ssub.s32 %s14, 2
      // Predicated region
      $region61: #{h_theta_adain_forward.1} parent=59 // pred_check
        %p2141 = pneg %p216
      $region62: #{h_theta_adain_forward.1} parent=59 // pred_check_branch
        %2143 = sbr.rel (%p2141) target = $region64
      $region63: #{h_theta_adain_forward.1} parent=59 // pred_region
        %s2144 = smul.u32 8, %s20
        %p2145 = scmp.lt.s32.totalorder %s2144, 31
        %s2146 = scalar_select %p2145, %s2144, 31
        %s2147 = smul.addr %s2146, 8
        %s2148 = scalar_lea.vmem %s8, %s2147
      $region64: #{h_theta_adain_forward.1} parent=59 // pred_fallthru
        _
    $region60: #{h_theta_adain_forward.1} parent=5 // pred_fallthru
      _
  $region6: #{h_theta_adain_forward.1} parent=0 // loop_footer
    %s18 = sadd.s32 1, %s14
  $region7: #{h_theta_adain_forward.1} parent=0 // loop_footer_branch
    %13 = sbr.rel target = $region3
  $region8: #{h_theta_adain_forward.1} parent=0 // loop_exit
    _

</llo_original>
